<compile_context>
chip_gen: v6e
topology: v6e:2x2x1
jax: 0.10.0
libtpu: 0.0.40
codegen_flags: <defaults>
</compile_context>

<pallas_src>
import jax
import jax.numpy as jnp
from jax.experimental import pallas as pl
from jax.experimental.pallas import tpu as pltpu


# ----------------------------- hyper-parameters ------------------------------
BATCH_SIZE = 8          # opt.BATCH_SIZE
SEQ_LEN = 8             # question length T
VOCAB = 50              # opt.quest_vob_size
EMB_DIM = 300           # fixed by the module (nn.Embedding(..., 300))
LSTM_UNIT_NUM = 32      # opt.LSTM_UNIT_NUM
MFB_FACTOR_NUM = 4      # opt.MFB_FACTOR_NUM
MFB_OUT_DIM = 32        # opt.MFB_OUT_DIM
JOINT_EMB_SIZE = MFB_FACTOR_NUM * MFB_OUT_DIM   # 128
IMAGE_CHANNEL = 64      # opt.IMAGE_CHANNEL
NUM_OUTPUT_UNITS = 16   # opt.NUM_OUTPUT_UNITS

# -------------------- packed weight-slab row layout (128 lanes) --------------
R_EMB = 0        # E'   = tanh(emb) @ w_ih + b_lstm        rows   0..49   (50,128)
R_WHH = 56       # w_hh                                    rows  56..87   (32,128)
R_WDATA = 88     # w_data (Linear_dataproj)                rows  88..119  (32,128)
R_WIMG = 120     # w_img  (Linear_imgproj)                 rows 120..183  (64,128)
R_BDATA = 184    # b_data                                  row  184       ( 1,128)
R_BIMG = 192     # b_img                                   row  192       ( 1,128)
R_POOL = 200     # 0/1 MFB pooling matrix                  rows 200..327  (128,32)
R_WPRED = 328    # w_pred (Linear_predict)                 rows 328..359  (32,16)
R_BPRED = 360    # b_pred                                  row  360       ( 1,16)
SLAB_ROWS = 368  # multiple of 8


# --------------------------- fused forward kernel -----------------------------
def mfb_fused_kernel(ints_ref, img_ref, w_ref, out_ref):
    T, B, H, J = SEQ_LEN, BATCH_SIZE, LSTM_UNIT_NUM, JOINT_EMB_SIZE

    # ---- packed int buffer: token ids (time-major) + word lengths -----------
    tok = ints_ref[0:T * B, :]                      # (T*B, 1) int32
    wl_t = ints_ref[T * B:T * B + B, :] - 1         # (B, 1) target time index

    # ---- embedding + input projection, algebraically fused ------------------
    # onehot @ (tanh(emb) @ w_ih + b) == tanh(emb[tok]) @ w_ih + b
    vocab_ids = jax.lax.broadcasted_iota(jnp.int32, (T * B, VOCAB), 1)
    onehot = (tok == vocab_ids).astype(jnp.float32)              # (T*B, VOCAB)
    e_fused = w_ref[R_EMB:R_EMB + VOCAB, :]                      # (VOCAB, 4H)
    gates_x = jnp.dot(onehot, e_fused,
                      preferred_element_type=jnp.float32)        # (T*B, 4H)

    whh = w_ref[R_WHH:R_WHH + H, :]                              # (H, 4H)

    # ---- unrolled LSTM recurrence, h/c as register carries ------------------
    h = jnp.zeros((B, H), jnp.float32)
    c = jnp.zeros((B, H), jnp.float32)
    q = jnp.zeros((B, H), jnp.float32)

    for t in range(T):                                           # T = 8, unrolled
        gates = gates_x[t * B:(t + 1) * B, :] + jnp.dot(
            h, whh, preferred_element_type=jnp.float32)          # (B, 4H)
        # full-width activations (2 EUP passes), then per-gate lane slices.
        sig = jax.nn.sigmoid(gates)
        tnh = jnp.tanh(gates)
        i_g = sig[:, 0 * H:1 * H]     # PyTorch gate order: i, f, g, o
        f_g = sig[:, 1 * H:2 * H]
        g_g = tnh[:, 2 * H:3 * H]
        o_g = sig[:, 3 * H:4 * H]
        c = f_g * c + i_g * g_g
        h = o_g * jnp.tanh(c)
        # q[b] = h_t[b] when t == word_length[b] - 1
        q = jnp.where(wl_t == t, h, q)

    # ---- MFB fusion (dropouts are identity in eval mode) --------------------
    d = jnp.dot(q, w_ref[R_WDATA:R_WDATA + H, :],
                preferred_element_type=jnp.float32) \
        + w_ref[R_BDATA:R_BDATA + 1, :]                          # (B, J)
    m = jnp.dot(img_ref[...], w_ref[R_WIMG:R_WIMG + IMAGE_CHANNEL, :],
                preferred_element_type=jnp.float32) \
        + w_ref[R_BIMG:R_BIMG + 1, :]                            # (B, J)
    iq = d * m                                                   # (B, J)

    # sum-pool over the MFB factor dim via a 0/1 pooling matmul (no reshape).
    pooled = jnp.dot(iq, w_ref[R_POOL:R_POOL + J, 0:MFB_OUT_DIM],
                     preferred_element_type=jnp.float32)         # (B, OUT_DIM)

    # signed square root
    signed = (jnp.sqrt(jnp.maximum(pooled, 0.0))
              - jnp.sqrt(jnp.maximum(-pooled, 0.0)))

    # L2 normalize (F.normalize, p=2, dim=1, eps=1e-12); divide on the EUP.
    norm = jnp.sqrt(jnp.sum(signed * signed, axis=1, keepdims=True))
    normed = signed * pl.reciprocal(jnp.maximum(norm, 1e-12), approx=True)

    # Linear_predict + log_softmax
    logits = jnp.dot(normed, w_ref[R_WPRED:R_WPRED + MFB_OUT_DIM, 0:NUM_OUTPUT_UNITS],
                     preferred_element_type=jnp.float32) \
        + w_ref[R_BPRED:R_BPRED + 1, 0:NUM_OUTPUT_UNITS]         # (B, NUM_OUT)
    mx = jnp.max(logits, axis=1, keepdims=True)
    shifted = logits - mx
    lse = jnp.log(jnp.sum(jnp.exp(shifted), axis=1, keepdims=True))
    out_ref[...] = shifted - lse


# ------------------------------- full forward --------------------------------
@jax.jit
def mfb_baseline_forward(weight_slab, data, word_length, img_feature):
    """weight_slab: packed (SLAB_ROWS,128) f32; data: (B,T) int32 token ids;
    word_length: (B,) int32; img_feature: (B, IMAGE_CHANNEL)."""
    B, T = data.shape
    # pack the two tiny int operands into one buffer (rows 0..T*B-1: time-major
    # tokens, rows T*B..T*B+B-1: word lengths).
    tok = jnp.transpose(data, (1, 0)).reshape(T * B).astype(jnp.int32)
    ints = jnp.concatenate([tok, word_length.astype(jnp.int32)]).reshape(T * B + B, 1)
    img = img_feature.astype(jnp.float32)

    vspec = pl.BlockSpec(memory_space=pltpu.MemorySpace.VMEM)
    return pl.pallas_call(
        mfb_fused_kernel,
        out_shape=jax.ShapeDtypeStruct((B, NUM_OUTPUT_UNITS), jnp.float32),
        in_specs=[vspec, vspec, vspec],
        out_specs=vspec,
    )(ints, img, weight_slab)


# ------------------------------ parameter packing -----------------------------
def pack_params(params):
    """One-time repack of the module parameters into a single 128-lane slab.
    Also performs the exact algebraic fusion E' = tanh(emb) @ w_ih + b_lstm."""
    H, J = LSTM_UNIT_NUM, JOINT_EMB_SIZE
    e_fused = jnp.tanh(params["emb"]) @ params["w_ih"] + params["b_lstm"]   # (VOCAB, 4H)

    slab = jnp.zeros((SLAB_ROWS, 128), jnp.float32)
    slab = slab.at[R_EMB:R_EMB + VOCAB, :].set(e_fused)
    slab = slab.at[R_WHH:R_WHH + H, :].set(params["w_hh"])
    slab = slab.at[R_WDATA:R_WDATA + H, :].set(params["w_data"])
    slab = slab.at[R_WIMG:R_WIMG + IMAGE_CHANNEL, :].set(params["w_img"])
    slab = slab.at[R_BDATA, :].set(params["b_data"][0])
    slab = slab.at[R_BIMG, :].set(params["b_img"][0])
    slab = slab.at[R_POOL:R_POOL + J, 0:MFB_OUT_DIM].set(params["pool"])
    slab = slab.at[R_WPRED:R_WPRED + MFB_OUT_DIM, 0:NUM_OUTPUT_UNITS].set(params["w_pred"])
    slab = slab.at[R_BPRED, 0:NUM_OUTPUT_UNITS].set(params["b_pred"][0])
    return slab


# ------------------------------- parameter init -------------------------------
def init_params(key):
    ks = jax.random.split(key, 10)
    H = LSTM_UNIT_NUM
    s = 0.05
    # pooling matrix: P[j, o] = 1 if j // FACTOR == o
    j_idx = jnp.arange(JOINT_EMB_SIZE)[:, None]
    o_idx = jnp.arange(MFB_OUT_DIM)[None, :]
    pool = (j_idx // MFB_FACTOR_NUM == o_idx).astype(jnp.float32)
    return {
        "emb": jax.random.normal(ks[0], (VOCAB, EMB_DIM), jnp.float32) * s,
        "w_ih": jax.random.normal(ks[1], (EMB_DIM, 4 * H), jnp.float32) * s,
        "w_hh": jax.random.normal(ks[2], (H, 4 * H), jnp.float32) * s,
        "b_lstm": jax.random.normal(ks[3], (1, 4 * H), jnp.float32) * s,  # b_ih + b_hh
        "w_data": jax.random.normal(ks[4], (H, JOINT_EMB_SIZE), jnp.float32) * s,
        "b_data": jax.random.normal(ks[5], (1, JOINT_EMB_SIZE), jnp.float32) * s,
        "w_img": jax.random.normal(ks[6], (IMAGE_CHANNEL, JOINT_EMB_SIZE), jnp.float32) * s,
        "b_img": jax.random.normal(ks[7], (1, JOINT_EMB_SIZE), jnp.float32) * s,
        "w_pred": jax.random.normal(ks[8], (MFB_OUT_DIM, NUM_OUTPUT_UNITS), jnp.float32) * s,
        "b_pred": jax.random.normal(ks[9], (1, NUM_OUTPUT_UNITS), jnp.float32) * s,
        "pool": pool,
    }


if __name__ == "__main__":
    key = jax.random.PRNGKey(0)
    kp, kd, kw, ki = jax.random.split(key, 4)

    params = init_params(kp)
    weight_slab = pack_params(params)      # one-time repack, off the forward path

    data = jax.random.randint(kd, (BATCH_SIZE, SEQ_LEN), 0, VOCAB, dtype=jnp.int32)
    word_length = jax.random.randint(kw, (BATCH_SIZE,), 1, SEQ_LEN + 1, dtype=jnp.int32)
    img_feature = jax.random.normal(ki, (BATCH_SIZE, IMAGE_CHANNEL), jnp.float32)

    out = mfb_baseline_forward(weight_slab, data, word_length, img_feature)
    out = jax.block_until_ready(out)

    assert out.shape == (BATCH_SIZE, NUM_OUTPUT_UNITS)
    assert bool(jnp.all(jnp.isfinite(out)))
    # rows of log_softmax should (approximately) exponentiate-sum to 1
    assert bool(jnp.allclose(jnp.sum(jnp.exp(out), axis=1), 1.0, atol=1e-4))
    print("KERNEL_OK")
</pallas_src>

<mosaic_0001>
module attributes {stable_mosaic.version = 11 : i64} {
  func.func @mfb_fused_kernel(%arg0: memref<72x1xi32, #tpu.memory_space<vmem>>, %arg1: memref<8x64xf32, #tpu.memory_space<vmem>>, %arg2: memref<368x128xf32, #tpu.memory_space<vmem>>, %arg3: memref<8x16xf32, #tpu.memory_space<vmem>>) attributes {dimension_semantics = [], scalar_prefetch = 0 : i64, scratch_operands = 0 : i64, tpu.core_type = #tpu.core_type<tc>} {
    %c0 = arith.constant 0 : index
    %c0_0 = arith.constant 0 : index
    %0 = vector.load %arg0[%c0, %c0_0] : memref<72x1xi32, #tpu.memory_space<vmem>>, vector<64x1xi32>
    %c64 = arith.constant 64 : index
    %c0_1 = arith.constant 0 : index
    %1 = vector.load %arg0[%c64, %c0_1] : memref<72x1xi32, #tpu.memory_space<vmem>>, vector<8x1xi32>
    %c1_i32 = arith.constant 1 : i32
    %2 = vector.broadcast %c1_i32 : i32 to vector<8x1xi32>
    %3 = arith.subi %1, %2 : vector<8x1xi32>
    %4 = tpu.iota {dimensions = array<i32: 1>} : vector<64x50xi32>
    %5 = vector.broadcast %0 : vector<64x1xi32> to vector<64x50xi32>
    %6 = arith.cmpi eq, %5, %4 : vector<64x50xi32>
    %7 = arith.extui %6 : vector<64x50xi1> to vector<64x50xi32>
    %8 = arith.sitofp %7 : vector<64x50xi32> to vector<64x50xf32>
    %c0_2 = arith.constant 0 : index
    %c0_3 = arith.constant 0 : index
    %9 = vector.load %arg2[%c0_2, %c0_3] : memref<368x128xf32, #tpu.memory_space<vmem>>, vector<50x128xf32>
    %cst = arith.constant dense<0.000000e+00> : vector<64x128xf32>
    %10 = tpu.matmul %8, %9, %cst {dimension_numbers = #tpu.dot_dimension_numbers<[1], [0], [0], [1], [0, 0, 1, 1], [], []>} : vector<64x50xf32>, vector<50x128xf32>, vector<64x128xf32> -> vector<64x128xf32>
    %c56 = arith.constant 56 : index
    %c0_4 = arith.constant 0 : index
    %11 = vector.load %arg2[%c56, %c0_4] : memref<368x128xf32, #tpu.memory_space<vmem>>, vector<32x128xf32>
    %cst_5 = arith.constant 0.000000e+00 : f32
    %12 = vector.broadcast %cst_5 : f32 to vector<8x32xf32>
    %cst_6 = arith.constant 0.000000e+00 : f32
    %13 = vector.broadcast %cst_6 : f32 to vector<8x32xf32>
    %cst_7 = arith.constant 0.000000e+00 : f32
    %14 = vector.broadcast %cst_7 : f32 to vector<8x32xf32>
    %15 = vector.extract_strided_slice %10 {offsets = [0, 0], sizes = [8, 128], strides = [1, 1]} : vector<64x128xf32> to vector<8x128xf32>
    %cst_8 = arith.constant dense<0.000000e+00> : vector<8x128xf32>
    %16 = tpu.matmul %12, %11, %cst_8 {dimension_numbers = #tpu.dot_dimension_numbers<[1], [0], [0], [1], [0, 0, 1, 1], [], []>} : vector<8x32xf32>, vector<32x128xf32>, vector<8x128xf32> -> vector<8x128xf32>
    %17 = arith.addf %15, %16 : vector<8x128xf32>
    %18 = arith.negf %17 : vector<8x128xf32>
    %19 = math.exp %18 : vector<8x128xf32>
    %cst_9 = arith.constant 1.000000e+00 : f32
    %20 = vector.broadcast %cst_9 : f32 to vector<8x128xf32>
    %21 = arith.addf %20, %19 : vector<8x128xf32>
    %22 = arith.divf %20, %21 : vector<8x128xf32>
    %23 = math.tanh %17 : vector<8x128xf32>
    %24 = vector.extract_strided_slice %22 {offsets = [0, 0], sizes = [8, 32], strides = [1, 1]} : vector<8x128xf32> to vector<8x32xf32>
    %25 = vector.extract_strided_slice %22 {offsets = [0, 32], sizes = [8, 32], strides = [1, 1]} : vector<8x128xf32> to vector<8x32xf32>
    %26 = vector.extract_strided_slice %23 {offsets = [0, 64], sizes = [8, 32], strides = [1, 1]} : vector<8x128xf32> to vector<8x32xf32>
    %27 = vector.extract_strided_slice %22 {offsets = [0, 96], sizes = [8, 32], strides = [1, 1]} : vector<8x128xf32> to vector<8x32xf32>
    %28 = arith.mulf %25, %13 : vector<8x32xf32>
    %29 = arith.mulf %24, %26 : vector<8x32xf32>
    %30 = arith.addf %28, %29 : vector<8x32xf32>
    %31 = math.tanh %30 : vector<8x32xf32>
    %32 = arith.mulf %27, %31 : vector<8x32xf32>
    %c0_i32 = arith.constant 0 : i32
    %33 = vector.broadcast %c0_i32 : i32 to vector<8x1xi32>
    %34 = arith.cmpi eq, %3, %33 : vector<8x1xi32>
    %35 = vector.shape_cast %34 : vector<8x1xi1> to vector<8x1xi1>
    %36 = vector.broadcast %35 : vector<8x1xi1> to vector<8x32xi1>
    %37 = arith.select %36, %32, %14 : vector<8x32xi1>, vector<8x32xf32>
    %38 = vector.extract_strided_slice %10 {offsets = [8, 0], sizes = [8, 128], strides = [1, 1]} : vector<64x128xf32> to vector<8x128xf32>
    %cst_10 = arith.constant dense<0.000000e+00> : vector<8x128xf32>
    %39 = tpu.matmul %32, %11, %cst_10 {dimension_numbers = #tpu.dot_dimension_numbers<[1], [0], [0], [1], [0, 0, 1, 1], [], []>} : vector<8x32xf32>, vector<32x128xf32>, vector<8x128xf32> -> vector<8x128xf32>
    %40 = arith.addf %38, %39 : vector<8x128xf32>
    %41 = arith.negf %40 : vector<8x128xf32>
    %42 = math.exp %41 : vector<8x128xf32>
    %cst_11 = arith.constant 1.000000e+00 : f32
    %43 = vector.broadcast %cst_11 : f32 to vector<8x128xf32>
    %44 = arith.addf %43, %42 : vector<8x128xf32>
    %45 = arith.divf %43, %44 : vector<8x128xf32>
    %46 = math.tanh %40 : vector<8x128xf32>
    %47 = vector.extract_strided_slice %45 {offsets = [0, 0], sizes = [8, 32], strides = [1, 1]} : vector<8x128xf32> to vector<8x32xf32>
    %48 = vector.extract_strided_slice %45 {offsets = [0, 32], sizes = [8, 32], strides = [1, 1]} : vector<8x128xf32> to vector<8x32xf32>
    %49 = vector.extract_strided_slice %46 {offsets = [0, 64], sizes = [8, 32], strides = [1, 1]} : vector<8x128xf32> to vector<8x32xf32>
    %50 = vector.extract_strided_slice %45 {offsets = [0, 96], sizes = [8, 32], strides = [1, 1]} : vector<8x128xf32> to vector<8x32xf32>
    %51 = arith.mulf %48, %30 : vector<8x32xf32>
    %52 = arith.mulf %47, %49 : vector<8x32xf32>
    %53 = arith.addf %51, %52 : vector<8x32xf32>
    %54 = math.tanh %53 : vector<8x32xf32>
    %55 = arith.mulf %50, %54 : vector<8x32xf32>
    %c1_i32_12 = arith.constant 1 : i32
    %56 = vector.broadcast %c1_i32_12 : i32 to vector<8x1xi32>
    %57 = arith.cmpi eq, %3, %56 : vector<8x1xi32>
    %58 = vector.shape_cast %57 : vector<8x1xi1> to vector<8x1xi1>
    %59 = vector.broadcast %58 : vector<8x1xi1> to vector<8x32xi1>
    %60 = arith.select %59, %55, %37 : vector<8x32xi1>, vector<8x32xf32>
    %61 = vector.extract_strided_slice %10 {offsets = [16, 0], sizes = [8, 128], strides = [1, 1]} : vector<64x128xf32> to vector<8x128xf32>
    %cst_13 = arith.constant dense<0.000000e+00> : vector<8x128xf32>
    %62 = tpu.matmul %55, %11, %cst_13 {dimension_numbers = #tpu.dot_dimension_numbers<[1], [0], [0], [1], [0, 0, 1, 1], [], []>} : vector<8x32xf32>, vector<32x128xf32>, vector<8x128xf32> -> vector<8x128xf32>
    %63 = arith.addf %61, %62 : vector<8x128xf32>
    %64 = arith.negf %63 : vector<8x128xf32>
    %65 = math.exp %64 : vector<8x128xf32>
    %cst_14 = arith.constant 1.000000e+00 : f32
    %66 = vector.broadcast %cst_14 : f32 to vector<8x128xf32>
    %67 = arith.addf %66, %65 : vector<8x128xf32>
    %68 = arith.divf %66, %67 : vector<8x128xf32>
    %69 = math.tanh %63 : vector<8x128xf32>
    %70 = vector.extract_strided_slice %68 {offsets = [0, 0], sizes = [8, 32], strides = [1, 1]} : vector<8x128xf32> to vector<8x32xf32>
    %71 = vector.extract_strided_slice %68 {offsets = [0, 32], sizes = [8, 32], strides = [1, 1]} : vector<8x128xf32> to vector<8x32xf32>
    %72 = vector.extract_strided_slice %69 {offsets = [0, 64], sizes = [8, 32], strides = [1, 1]} : vector<8x128xf32> to vector<8x32xf32>
    %73 = vector.extract_strided_slice %68 {offsets = [0, 96], sizes = [8, 32], strides = [1, 1]} : vector<8x128xf32> to vector<8x32xf32>
    %74 = arith.mulf %71, %53 : vector<8x32xf32>
    %75 = arith.mulf %70, %72 : vector<8x32xf32>
    %76 = arith.addf %74, %75 : vector<8x32xf32>
    %77 = math.tanh %76 : vector<8x32xf32>
    %78 = arith.mulf %73, %77 : vector<8x32xf32>
    %c2_i32 = arith.constant 2 : i32
    %79 = vector.broadcast %c2_i32 : i32 to vector<8x1xi32>
    %80 = arith.cmpi eq, %3, %79 : vector<8x1xi32>
    %81 = vector.shape_cast %80 : vector<8x1xi1> to vector<8x1xi1>
    %82 = vector.broadcast %81 : vector<8x1xi1> to vector<8x32xi1>
    %83 = arith.select %82, %78, %60 : vector<8x32xi1>, vector<8x32xf32>
    %84 = vector.extract_strided_slice %10 {offsets = [24, 0], sizes = [8, 128], strides = [1, 1]} : vector<64x128xf32> to vector<8x128xf32>
    %cst_15 = arith.constant dense<0.000000e+00> : vector<8x128xf32>
    %85 = tpu.matmul %78, %11, %cst_15 {dimension_numbers = #tpu.dot_dimension_numbers<[1], [0], [0], [1], [0, 0, 1, 1], [], []>} : vector<8x32xf32>, vector<32x128xf32>, vector<8x128xf32> -> vector<8x128xf32>
    %86 = arith.addf %84, %85 : vector<8x128xf32>
    %87 = arith.negf %86 : vector<8x128xf32>
    %88 = math.exp %87 : vector<8x128xf32>
    %cst_16 = arith.constant 1.000000e+00 : f32
    %89 = vector.broadcast %cst_16 : f32 to vector<8x128xf32>
    %90 = arith.addf %89, %88 : vector<8x128xf32>
    %91 = arith.divf %89, %90 : vector<8x128xf32>
    %92 = math.tanh %86 : vector<8x128xf32>
    %93 = vector.extract_strided_slice %91 {offsets = [0, 0], sizes = [8, 32], strides = [1, 1]} : vector<8x128xf32> to vector<8x32xf32>
    %94 = vector.extract_strided_slice %91 {offsets = [0, 32], sizes = [8, 32], strides = [1, 1]} : vector<8x128xf32> to vector<8x32xf32>
    %95 = vector.extract_strided_slice %92 {offsets = [0, 64], sizes = [8, 32], strides = [1, 1]} : vector<8x128xf32> to vector<8x32xf32>
    %96 = vector.extract_strided_slice %91 {offsets = [0, 96], sizes = [8, 32], strides = [1, 1]} : vector<8x128xf32> to vector<8x32xf32>
    %97 = arith.mulf %94, %76 : vector<8x32xf32>
    %98 = arith.mulf %93, %95 : vector<8x32xf32>
    %99 = arith.addf %97, %98 : vector<8x32xf32>
    %100 = math.tanh %99 : vector<8x32xf32>
    %101 = arith.mulf %96, %100 : vector<8x32xf32>
    %c3_i32 = arith.constant 3 : i32
    %102 = vector.broadcast %c3_i32 : i32 to vector<8x1xi32>
    %103 = arith.cmpi eq, %3, %102 : vector<8x1xi32>
    %104 = vector.shape_cast %103 : vector<8x1xi1> to vector<8x1xi1>
    %105 = vector.broadcast %104 : vector<8x1xi1> to vector<8x32xi1>
    %106 = arith.select %105, %101, %83 : vector<8x32xi1>, vector<8x32xf32>
    %107 = vector.extract_strided_slice %10 {offsets = [32, 0], sizes = [8, 128], strides = [1, 1]} : vector<64x128xf32> to vector<8x128xf32>
    %cst_17 = arith.constant dense<0.000000e+00> : vector<8x128xf32>
    %108 = tpu.matmul %101, %11, %cst_17 {dimension_numbers = #tpu.dot_dimension_numbers<[1], [0], [0], [1], [0, 0, 1, 1], [], []>} : vector<8x32xf32>, vector<32x128xf32>, vector<8x128xf32> -> vector<8x128xf32>
    %109 = arith.addf %107, %108 : vector<8x128xf32>
    %110 = arith.negf %109 : vector<8x128xf32>
    %111 = math.exp %110 : vector<8x128xf32>
    %cst_18 = arith.constant 1.000000e+00 : f32
    %112 = vector.broadcast %cst_18 : f32 to vector<8x128xf32>
    %113 = arith.addf %112, %111 : vector<8x128xf32>
    %114 = arith.divf %112, %113 : vector<8x128xf32>
    %115 = math.tanh %109 : vector<8x128xf32>
    %116 = vector.extract_strided_slice %114 {offsets = [0, 0], sizes = [8, 32], strides = [1, 1]} : vector<8x128xf32> to vector<8x32xf32>
    %117 = vector.extract_strided_slice %114 {offsets = [0, 32], sizes = [8, 32], strides = [1, 1]} : vector<8x128xf32> to vector<8x32xf32>
    %118 = vector.extract_strided_slice %115 {offsets = [0, 64], sizes = [8, 32], strides = [1, 1]} : vector<8x128xf32> to vector<8x32xf32>
    %119 = vector.extract_strided_slice %114 {offsets = [0, 96], sizes = [8, 32], strides = [1, 1]} : vector<8x128xf32> to vector<8x32xf32>
    %120 = arith.mulf %117, %99 : vector<8x32xf32>
    %121 = arith.mulf %116, %118 : vector<8x32xf32>
    %122 = arith.addf %120, %121 : vector<8x32xf32>
    %123 = math.tanh %122 : vector<8x32xf32>
    %124 = arith.mulf %119, %123 : vector<8x32xf32>
    %c4_i32 = arith.constant 4 : i32
    %125 = vector.broadcast %c4_i32 : i32 to vector<8x1xi32>
    %126 = arith.cmpi eq, %3, %125 : vector<8x1xi32>
    %127 = vector.shape_cast %126 : vector<8x1xi1> to vector<8x1xi1>
    %128 = vector.broadcast %127 : vector<8x1xi1> to vector<8x32xi1>
    %129 = arith.select %128, %124, %106 : vector<8x32xi1>, vector<8x32xf32>
    %130 = vector.extract_strided_slice %10 {offsets = [40, 0], sizes = [8, 128], strides = [1, 1]} : vector<64x128xf32> to vector<8x128xf32>
    %cst_19 = arith.constant dense<0.000000e+00> : vector<8x128xf32>
    %131 = tpu.matmul %124, %11, %cst_19 {dimension_numbers = #tpu.dot_dimension_numbers<[1], [0], [0], [1], [0, 0, 1, 1], [], []>} : vector<8x32xf32>, vector<32x128xf32>, vector<8x128xf32> -> vector<8x128xf32>
    %132 = arith.addf %130, %131 : vector<8x128xf32>
    %133 = arith.negf %132 : vector<8x128xf32>
    %134 = math.exp %133 : vector<8x128xf32>
    %cst_20 = arith.constant 1.000000e+00 : f32
    %135 = vector.broadcast %cst_20 : f32 to vector<8x128xf32>
    %136 = arith.addf %135, %134 : vector<8x128xf32>
    %137 = arith.divf %135, %136 : vector<8x128xf32>
    %138 = math.tanh %132 : vector<8x128xf32>
    %139 = vector.extract_strided_slice %137 {offsets = [0, 0], sizes = [8, 32], strides = [1, 1]} : vector<8x128xf32> to vector<8x32xf32>
    %140 = vector.extract_strided_slice %137 {offsets = [0, 32], sizes = [8, 32], strides = [1, 1]} : vector<8x128xf32> to vector<8x32xf32>
    %141 = vector.extract_strided_slice %138 {offsets = [0, 64], sizes = [8, 32], strides = [1, 1]} : vector<8x128xf32> to vector<8x32xf32>
    %142 = vector.extract_strided_slice %137 {offsets = [0, 96], sizes = [8, 32], strides = [1, 1]} : vector<8x128xf32> to vector<8x32xf32>
    %143 = arith.mulf %140, %122 : vector<8x32xf32>
    %144 = arith.mulf %139, %141 : vector<8x32xf32>
    %145 = arith.addf %143, %144 : vector<8x32xf32>
    %146 = math.tanh %145 : vector<8x32xf32>
    %147 = arith.mulf %142, %146 : vector<8x32xf32>
    %c5_i32 = arith.constant 5 : i32
    %148 = vector.broadcast %c5_i32 : i32 to vector<8x1xi32>
    %149 = arith.cmpi eq, %3, %148 : vector<8x1xi32>
    %150 = vector.shape_cast %149 : vector<8x1xi1> to vector<8x1xi1>
    %151 = vector.broadcast %150 : vector<8x1xi1> to vector<8x32xi1>
    %152 = arith.select %151, %147, %129 : vector<8x32xi1>, vector<8x32xf32>
    %153 = vector.extract_strided_slice %10 {offsets = [48, 0], sizes = [8, 128], strides = [1, 1]} : vector<64x128xf32> to vector<8x128xf32>
    %cst_21 = arith.constant dense<0.000000e+00> : vector<8x128xf32>
    %154 = tpu.matmul %147, %11, %cst_21 {dimension_numbers = #tpu.dot_dimension_numbers<[1], [0], [0], [1], [0, 0, 1, 1], [], []>} : vector<8x32xf32>, vector<32x128xf32>, vector<8x128xf32> -> vector<8x128xf32>
    %155 = arith.addf %153, %154 : vector<8x128xf32>
    %156 = arith.negf %155 : vector<8x128xf32>
    %157 = math.exp %156 : vector<8x128xf32>
    %cst_22 = arith.constant 1.000000e+00 : f32
    %158 = vector.broadcast %cst_22 : f32 to vector<8x128xf32>
    %159 = arith.addf %158, %157 : vector<8x128xf32>
    %160 = arith.divf %158, %159 : vector<8x128xf32>
    %161 = math.tanh %155 : vector<8x128xf32>
    %162 = vector.extract_strided_slice %160 {offsets = [0, 0], sizes = [8, 32], strides = [1, 1]} : vector<8x128xf32> to vector<8x32xf32>
    %163 = vector.extract_strided_slice %160 {offsets = [0, 32], sizes = [8, 32], strides = [1, 1]} : vector<8x128xf32> to vector<8x32xf32>
    %164 = vector.extract_strided_slice %161 {offsets = [0, 64], sizes = [8, 32], strides = [1, 1]} : vector<8x128xf32> to vector<8x32xf32>
    %165 = vector.extract_strided_slice %160 {offsets = [0, 96], sizes = [8, 32], strides = [1, 1]} : vector<8x128xf32> to vector<8x32xf32>
    %166 = arith.mulf %163, %145 : vector<8x32xf32>
    %167 = arith.mulf %162, %164 : vector<8x32xf32>
    %168 = arith.addf %166, %167 : vector<8x32xf32>
    %169 = math.tanh %168 : vector<8x32xf32>
    %170 = arith.mulf %165, %169 : vector<8x32xf32>
    %c6_i32 = arith.constant 6 : i32
    %171 = vector.broadcast %c6_i32 : i32 to vector<8x1xi32>
    %172 = arith.cmpi eq, %3, %171 : vector<8x1xi32>
    %173 = vector.shape_cast %172 : vector<8x1xi1> to vector<8x1xi1>
    %174 = vector.broadcast %173 : vector<8x1xi1> to vector<8x32xi1>
    %175 = arith.select %174, %170, %152 : vector<8x32xi1>, vector<8x32xf32>
    %176 = vector.extract_strided_slice %10 {offsets = [56, 0], sizes = [8, 128], strides = [1, 1]} : vector<64x128xf32> to vector<8x128xf32>
    %cst_23 = arith.constant dense<0.000000e+00> : vector<8x128xf32>
    %177 = tpu.matmul %170, %11, %cst_23 {dimension_numbers = #tpu.dot_dimension_numbers<[1], [0], [0], [1], [0, 0, 1, 1], [], []>} : vector<8x32xf32>, vector<32x128xf32>, vector<8x128xf32> -> vector<8x128xf32>
    %178 = arith.addf %176, %177 : vector<8x128xf32>
    %179 = arith.negf %178 : vector<8x128xf32>
    %180 = math.exp %179 : vector<8x128xf32>
    %cst_24 = arith.constant 1.000000e+00 : f32
    %181 = vector.broadcast %cst_24 : f32 to vector<8x128xf32>
    %182 = arith.addf %181, %180 : vector<8x128xf32>
    %183 = arith.divf %181, %182 : vector<8x128xf32>
    %184 = math.tanh %178 : vector<8x128xf32>
    %185 = vector.extract_strided_slice %183 {offsets = [0, 0], sizes = [8, 32], strides = [1, 1]} : vector<8x128xf32> to vector<8x32xf32>
    %186 = vector.extract_strided_slice %183 {offsets = [0, 32], sizes = [8, 32], strides = [1, 1]} : vector<8x128xf32> to vector<8x32xf32>
    %187 = vector.extract_strided_slice %184 {offsets = [0, 64], sizes = [8, 32], strides = [1, 1]} : vector<8x128xf32> to vector<8x32xf32>
    %188 = vector.extract_strided_slice %183 {offsets = [0, 96], sizes = [8, 32], strides = [1, 1]} : vector<8x128xf32> to vector<8x32xf32>
    %189 = arith.mulf %186, %168 : vector<8x32xf32>
    %190 = arith.mulf %185, %187 : vector<8x32xf32>
    %191 = arith.addf %189, %190 : vector<8x32xf32>
    %192 = math.tanh %191 : vector<8x32xf32>
    %193 = arith.mulf %188, %192 : vector<8x32xf32>
    %c7_i32 = arith.constant 7 : i32
    %194 = vector.broadcast %c7_i32 : i32 to vector<8x1xi32>
    %195 = arith.cmpi eq, %3, %194 : vector<8x1xi32>
    %196 = vector.shape_cast %195 : vector<8x1xi1> to vector<8x1xi1>
    %197 = vector.broadcast %196 : vector<8x1xi1> to vector<8x32xi1>
    %198 = arith.select %197, %193, %175 : vector<8x32xi1>, vector<8x32xf32>
    %c88 = arith.constant 88 : index
    %c0_25 = arith.constant 0 : index
    %199 = vector.load %arg2[%c88, %c0_25] : memref<368x128xf32, #tpu.memory_space<vmem>>, vector<32x128xf32>
    %cst_26 = arith.constant dense<0.000000e+00> : vector<8x128xf32>
    %200 = tpu.matmul %198, %199, %cst_26 {dimension_numbers = #tpu.dot_dimension_numbers<[1], [0], [0], [1], [0, 0, 1, 1], [], []>} : vector<8x32xf32>, vector<32x128xf32>, vector<8x128xf32> -> vector<8x128xf32>
    %c184 = arith.constant 184 : index
    %c0_27 = arith.constant 0 : index
    %201 = vector.load %arg2[%c184, %c0_27] : memref<368x128xf32, #tpu.memory_space<vmem>>, vector<1x128xf32>
    %202 = vector.broadcast %201 : vector<1x128xf32> to vector<8x128xf32>
    %203 = arith.addf %200, %202 : vector<8x128xf32>
    %c0_28 = arith.constant 0 : index
    %c0_29 = arith.constant 0 : index
    %204 = vector.load %arg1[%c0_28, %c0_29] : memref<8x64xf32, #tpu.memory_space<vmem>>, vector<8x64xf32>
    %c120 = arith.constant 120 : index
    %c0_30 = arith.constant 0 : index
    %205 = vector.load %arg2[%c120, %c0_30] : memref<368x128xf32, #tpu.memory_space<vmem>>, vector<64x128xf32>
    %cst_31 = arith.constant dense<0.000000e+00> : vector<8x128xf32>
    %206 = tpu.matmul %204, %205, %cst_31 {dimension_numbers = #tpu.dot_dimension_numbers<[1], [0], [0], [1], [0, 0, 1, 1], [], []>} : vector<8x64xf32>, vector<64x128xf32>, vector<8x128xf32> -> vector<8x128xf32>
    %c192 = arith.constant 192 : index
    %c0_32 = arith.constant 0 : index
    %207 = vector.load %arg2[%c192, %c0_32] : memref<368x128xf32, #tpu.memory_space<vmem>>, vector<1x128xf32>
    %208 = vector.broadcast %207 : vector<1x128xf32> to vector<8x128xf32>
    %209 = arith.addf %206, %208 : vector<8x128xf32>
    %210 = arith.mulf %203, %209 : vector<8x128xf32>
    %c200 = arith.constant 200 : index
    %c0_33 = arith.constant 0 : index
    %211 = vector.load %arg2[%c200, %c0_33] : memref<368x128xf32, #tpu.memory_space<vmem>>, vector<128x32xf32>
    %cst_34 = arith.constant dense<0.000000e+00> : vector<8x32xf32>
    %212 = tpu.matmul %210, %211, %cst_34 {dimension_numbers = #tpu.dot_dimension_numbers<[1], [0], [0], [1], [0, 0, 1, 1], [], []>} : vector<8x128xf32>, vector<128x32xf32>, vector<8x32xf32> -> vector<8x32xf32>
    %cst_35 = arith.constant 0.000000e+00 : f32
    %213 = vector.broadcast %cst_35 : f32 to vector<8x32xf32>
    %214 = arith.maximumf %212, %213 : vector<8x32xf32>
    %215 = math.sqrt %214 : vector<8x32xf32>
    %cst_36 = arith.constant 0.000000e+00 : f32
    %216 = vector.broadcast %cst_36 : f32 to vector<8x32xf32>
    %217 = arith.subf %216, %212 : vector<8x32xf32>
    %cst_37 = arith.constant 0.000000e+00 : f32
    %218 = vector.broadcast %cst_37 : f32 to vector<8x32xf32>
    %219 = arith.maximumf %217, %218 : vector<8x32xf32>
    %220 = math.sqrt %219 : vector<8x32xf32>
    %221 = arith.subf %215, %220 : vector<8x32xf32>
    %222 = arith.mulf %221, %221 : vector<8x32xf32>
    %cst_38 = arith.constant dense<0.000000e+00> : vector<8xf32>
    %223 = vector.multi_reduction <add>, %222, %cst_38 [1] : vector<8x32xf32> to vector<8xf32>
    %224 = vector.shape_cast %223 : vector<8xf32> to vector<8x1xf32>
    %225 = math.sqrt %224 : vector<8x1xf32>
    %cst_39 = arith.constant 9.99999996E-13 : f32
    %226 = vector.broadcast %cst_39 : f32 to vector<8x1xf32>
    %227 = arith.maximumf %225, %226 : vector<8x1xf32>
    %228 = tpu.reciprocal %227 {approx = true} : vector<8x1xf32> -> vector<8x1xf32>
    %229 = vector.broadcast %228 : vector<8x1xf32> to vector<8x32xf32>
    %230 = arith.mulf %221, %229 : vector<8x32xf32>
    %c328 = arith.constant 328 : index
    %c0_40 = arith.constant 0 : index
    %231 = vector.load %arg2[%c328, %c0_40] : memref<368x128xf32, #tpu.memory_space<vmem>>, vector<32x16xf32>
    %cst_41 = arith.constant dense<0.000000e+00> : vector<8x16xf32>
    %232 = tpu.matmul %230, %231, %cst_41 {dimension_numbers = #tpu.dot_dimension_numbers<[1], [0], [0], [1], [0, 0, 1, 1], [], []>} : vector<8x32xf32>, vector<32x16xf32>, vector<8x16xf32> -> vector<8x16xf32>
    %c360 = arith.constant 360 : index
    %c0_42 = arith.constant 0 : index
    %233 = vector.load %arg2[%c360, %c0_42] : memref<368x128xf32, #tpu.memory_space<vmem>>, vector<1x16xf32>
    %234 = vector.broadcast %233 : vector<1x16xf32> to vector<8x16xf32>
    %235 = arith.addf %232, %234 : vector<8x16xf32>
    %cst_43 = arith.constant dense<0xFF800000> : vector<8xf32>
    %236 = vector.multi_reduction <maximumf>, %235, %cst_43 [1] : vector<8x16xf32> to vector<8xf32>
    %237 = vector.shape_cast %236 : vector<8xf32> to vector<8x1xf32>
    %238 = vector.broadcast %237 : vector<8x1xf32> to vector<8x16xf32>
    %239 = arith.subf %235, %238 : vector<8x16xf32>
    %240 = math.exp %239 : vector<8x16xf32>
    %cst_44 = arith.constant dense<0.000000e+00> : vector<8xf32>
    %241 = vector.multi_reduction <add>, %240, %cst_44 [1] : vector<8x16xf32> to vector<8xf32>
    %242 = vector.shape_cast %241 : vector<8xf32> to vector<8x1xf32>
    %243 = math.log %242 : vector<8x1xf32>
    %244 = vector.broadcast %243 : vector<8x1xf32> to vector<8x16xf32>
    %245 = arith.subf %239, %244 : vector<8x16xf32>
    %c0_45 = arith.constant 0 : index
    %c0_46 = arith.constant 0 : index
    %246 = vector.load %arg3[%c0_45, %c0_46] : memref<8x16xf32, #tpu.memory_space<vmem>>, vector<8x16xf32>
    tpu.vector_store %arg3[%c0_45, %c0_46], %245 {strides = array<i32>} : memref<8x16xf32, #tpu.memory_space<vmem>>, vector<8x16xf32>,
    return
  }
}

</mosaic_0001>

<llo_original>
// kernel: mfb_baseline_forward.1
$region0: #{mfb_baseline_forward.1}
  #allocation0 [shape = 'u32[]', space=smem, size = 0x4, offset = 0x4, fixed_abs, tag = 'smem constant byte address 0x4 - core index']
  #allocation1 [shape = 'u32[144,128]{1,0:T(1,128)}', space=vmem, size = 0x12000, scoped, tag = 'internal scratch']
  %s0 = inlined_call_operand.vmem [shape: s32[72,1], index: 0, kind: input, shape index: {}]
  %s1 = inlined_call_operand.vmem [shape: f32[8,64], index: 1, kind: input, shape index: {}]
  %s2 = inlined_call_operand.hbm [shape: f32[368,128], index: 2, kind: input, shape index: {}]
  %s3 = inlined_call_operand.hbm [shape: f32[8,16], index: 3, kind: output, shape index: {}]
  %s4 = sld [smem:[#allocation0]]
  $region26: #{mfb_baseline_forward.1} parent=0
    _
  %s6 = ssub.s32 1, %s4
  %s7 = scalar_select 0, %s6, %s4
  $region1: #{mfb_baseline_forward.1} parent=0
    #allocation2 [shape = 'u8[188416]{0}', space=vmem, size = 0x2e000, scoped, tag = 'input window, operand 2, single buffered']
    #allocation3 [shape = 's32[1]{0}', space=sflag, size = 0x4, scoped, tag = 'scoped memory for mfb_baseline_forward.1']
    #allocation4 [shape = 's32[1]{0}', space=sflag, size = 0x4, scoped, tag = 'scoped memory for mfb_baseline_forward.1']
    #allocation5 [shape = 'u8[4096]{0}', space=vmem, size = 0x1000, scoped, tag = 'output window, operand 0, single buffered']
    %8 = vsyncpa [#allocation3], 0
    %9 = vsyncpa [#allocation4], 0
    // Predicated region
    $region2: #{mfb_baseline_forward.1} parent=1 // pred_check
      _
    $region3: #{mfb_baseline_forward.1} parent=1 // pred_check_branch
      %11 = sbr.rel (0) target = $region5
    $region4: #{mfb_baseline_forward.1} parent=1 // pred_region
      _
    $region5: #{mfb_baseline_forward.1} parent=1 // pred_fallthru
      _
    // Predicated region
    $region6: #{mfb_baseline_forward.1} parent=1 // pred_check
      _
    $region7: #{mfb_baseline_forward.1} parent=1 // pred_check_branch
      %13 = sbr.rel (0) target = $region9
    $region8: #{mfb_baseline_forward.1} parent=1 // pred_region
      _
    $region9: #{mfb_baseline_forward.1} parent=1 // pred_fallthru
      _
    // Predicated region
    $region10: #{mfb_baseline_forward.1} parent=1 // pred_check
      _
    $region11: #{mfb_baseline_forward.1} parent=1 // pred_check_branch
      %15 = sbr.rel (0) target = $region13
    $region12: #{mfb_baseline_forward.1} parent=1 // pred_region
      %s17 = ssub.s32 5888, 5888
      %18 = vsyncadd [#allocation3], %s17
      %s19 = sshll.u32 [#allocation2], 4
      %s20 = int_to_ptr.vmem [resolvable:$true] %s19
      %25 = dma.hbm_to_vmem [thread:$0]  %s2, 5888, %s20, [#allocation3], 128, 128, 8
    $region13: #{mfb_baseline_forward.1} parent=1 // pred_fallthru
      _
    // Predicated region
    $region14: #{mfb_baseline_forward.1} parent=1 // pred_check
      _
    $region15: #{mfb_baseline_forward.1} parent=1 // pred_check_branch
      %27 = sbr.rel (0) target = $region17
    $region16: #{mfb_baseline_forward.1} parent=1 // pred_region
      %28 = dma.done [#allocation3], 5888
    $region17: #{mfb_baseline_forward.1} parent=1 // pred_fallthru
      _
    %v29 = vld [vmem:[%s0] sm:$0xff]
    %v30 = vld [vmem:[%s0 + $0x8] sm:$0xff]
    %v31 = vld [vmem:[%s0 + $0x10] sm:$0xff]
    %v32 = vld [vmem:[%s0 + $0x18] sm:$0xff]
    %v33 = vld [vmem:[%s0 + $0x20] sm:$0xff]
    %v34 = vld [vmem:[%s0 + $0x28] sm:$0xff]
    %v35 = vld [vmem:[%s0 + $0x30] sm:$0xff]
    %v36 = vld [vmem:[%s0 + $0x38] sm:$0xff]
    %v37 = vld [vmem:[%s0 + $0x40] sm:$0xff]
    %v38 = vsub.s32 %v37, 1
    %v39 = vlaneseq
    %v40 = vand.u32 %v39, 127
    %41 = vset.pattern.permute.xlu0 0
    %42 = vperm.xlu0 %41, %v29
    %v43 = vpop.permute.xlu0 %42
    %44 = vset.pattern.permute.xlu0 0
    %45 = vperm.xlu0 %44, %v30
    %v46 = vpop.permute.xlu0 %45
    %47 = vset.pattern.permute.xlu0 0
    %48 = vperm.xlu0 %47, %v31
    %v49 = vpop.permute.xlu0 %48
    %50 = vset.pattern.permute.xlu0 0
    %51 = vperm.xlu0 %50, %v32
    %v52 = vpop.permute.xlu0 %51
    %53 = vset.pattern.permute.xlu0 0
    %54 = vperm.xlu0 %53, %v33
    %v55 = vpop.permute.xlu0 %54
    %56 = vset.pattern.permute.xlu0 0
    %57 = vperm.xlu0 %56, %v34
    %v58 = vpop.permute.xlu0 %57
    %59 = vset.pattern.permute.xlu0 0
    %60 = vperm.xlu0 %59, %v35
    %v61 = vpop.permute.xlu0 %60
    %62 = vset.pattern.permute.xlu0 0
    %63 = vperm.xlu0 %62, %v36
    %v64 = vpop.permute.xlu0 %63
    %vm65 = vcmp.eq.s32.totalorder %v43, %v40
    %vm66 = vcmp.eq.s32.totalorder %v46, %v40
    %vm67 = vcmp.eq.s32.totalorder %v49, %v40
    %vm68 = vcmp.eq.s32.totalorder %v52, %v40
    %vm69 = vcmp.eq.s32.totalorder %v55, %v40
    %vm70 = vcmp.eq.s32.totalorder %v58, %v40
    %vm71 = vcmp.eq.s32.totalorder %v61, %v40
    %vm72 = vcmp.eq.s32.totalorder %v64, %v40
    %v73 = vsel %vm65, 1, 0
    %v74 = vsel %vm66, 1, 0
    %v75 = vsel %vm67, 1, 0
    %v76 = vsel %vm68, 1, 0
    %v77 = vsel %vm69, 1, 0
    %v78 = vsel %vm70, 1, 0
    %v79 = vsel %vm71, 1, 0
    %v80 = vsel %vm72, 1, 0
    %v81 = vcvt.s32.f32 %v73
    %v82 = vcvt.s32.f32 %v74
    %v83 = vcvt.s32.f32 %v75
    %v84 = vcvt.s32.f32 %v76
    %v85 = vcvt.s32.f32 %v77
    %v86 = vcvt.s32.f32 %v78
    %v87 = vcvt.s32.f32 %v79
    %v88 = vcvt.s32.f32 %v80
    %v89 = vld [vmem:[#allocation2] sm:$0xff]
    %v90 = vld [vmem:[#allocation2 + $0x8] sm:$0xff]
    %v91 = vld [vmem:[#allocation2 + $0x10] sm:$0xff]
    %v92 = vld [vmem:[#allocation2 + $0x18] sm:$0xff]
    %v93 = vld [vmem:[#allocation2 + $0x20] sm:$0xff]
    %v94 = vld [vmem:[#allocation2 + $0x28] sm:$0xff]
    %v95 = vld [vmem:[#allocation2 + $0x30] sm:$0x3]
    %vm96 = vcmask 408576
    %v98 = vsel %vm96, %v81, 0
    %v101 = vsel %vm96, %v82, 0
    %v104 = vsel %vm96, %v83, 0
    %v107 = vsel %vm96, %v84, 0
    %v110 = vsel %vm96, %v85, 0
    %v113 = vsel %vm96, %v86, 0
    %v116 = vsel %vm96, %v87, 0
    %v119 = vsel %vm96, %v88, 0
    %vm121 = vcmask 1041408
    %v123 = vsel %vm121, %v95, 0
    %125 = vmatprep.subr.mxu0 0.0
    %126 = vmatpush1.msra.mxu0 0.0
    %127 = vmatprep.subr.mxu0 0.0
    %128 = vmatpush1.msra.mxu0 0.0
    %129 = vmatprep.subr.mxu0 0.0
    %130 = vmatpush1.msra.mxu0 0.0
    %131 = vmatprep.subr.mxu0 0.0
    %132 = vmatpush1.msra.mxu0 0.0
    %133 = vmatprep.subr.mxu0 0.0
    %134 = vmatpush1.msra.mxu0 0.0
    %135 = vmatprep.subr.mxu0 0.0
    %136 = vmatpush1.msra.mxu0 0.0
    %137 = vmatprep.subr.mxu0 0.0
    %138 = vmatpush1.msra.mxu0 0.0
    %139 = vmatprep.subr.mxu0 0.0
    %140 = vmatpush1.msra.mxu0 0.0
    %141 = vmatprep.subr.mxu0 0.0
    %142 = vmatpush1.msra.mxu0 0.0
    %143 = vmatprep.subr.mxu0 0.0
    %144 = vmatpush1.msra.mxu0 %v123
    %145 = vmatprep.subr.mxu0 0.0
    %146 = vmatpush1.msra.mxu0 %v94
    %147 = vmatprep.subr.mxu0 0.0
    %148 = vmatpush1.msra.mxu0 %v93
    %149 = vmatprep.subr.mxu0 0.0
    %150 = vmatpush1.msra.mxu0 %v92
    %151 = vmatprep.subr.mxu0 0.0
    %152 = vmatpush1.msra.mxu0 %v91
    %153 = vmatprep.subr.mxu0 0.0
    %154 = vmatpush1.msra.mxu0 %v90
    %155 = vmatprep.subr.mxu0 0.0
    %156 = vmatpush1.msra.mxu0 %v89
    %157 = vmatprep.subr.mxu0 0.0
    %158 = vmatpush2.msra.mxu0 0.0
    %159 = vmatprep.subr.mxu0 0.0
    %160 = vmatpush2.msra.mxu0 0.0
    %161 = vmatprep.subr.mxu0 0.0
    %162 = vmatpush2.msra.mxu0 0.0
    %163 = vmatprep.subr.mxu0 0.0
    %164 = vmatpush2.msra.mxu0 0.0
    %165 = vmatprep.subr.mxu0 0.0
    %166 = vmatpush2.msra.mxu0 0.0
    %167 = vmatprep.subr.mxu0 0.0
    %168 = vmatpush2.msra.mxu0 0.0
    %169 = vmatprep.subr.mxu0 0.0
    %170 = vmatpush2.msra.mxu0 0.0
    %171 = vmatprep.subr.mxu0 0.0
    %172 = vmatpush2.msra.mxu0 0.0
    %173 = vmatprep.subr.mxu0 0.0
    %174 = vmatpush2.msra.mxu0 0.0
    %175 = vmatprep.subr.mxu0 0.0
    %176 = vmatpush2.msra.mxu0 0.0
    %177 = vmatprep.subr.mxu0 0.0
    %178 = vmatpush2.msra.mxu0 0.0
    %179 = vmatprep.subr.mxu0 0.0
    %180 = vmatpush2.msra.mxu0 0.0
    %181 = vmatprep.subr.mxu0 0.0
    %182 = vmatpush2.msra.mxu0 0.0
    %183 = vmatprep.subr.mxu0 0.0
    %184 = vmatpush2.msra.mxu0 0.0
    %185 = vmatprep.subr.mxu0 0.0
    %186 = vmatpush2.msra.mxu0 0.0
    %187 = vmatprep.subr.mxu0 0.0
    %188 = vmatpush2.msra.mxu0 0.0
    %189 = vmatprep.mubr.f32.mxu0 0.0
    %190 = vmatmul.mubr.f32.gmra.mxu0 %v98
    %v191 = vpop.f32.mrf.mxu0
    %v192 = vadd.f32 0.0, %v191
    %v193 = vpop.f32.mrf.mxu0
    %194 = vmatprep.mubr.f32.mxu0 0.0
    %195 = vmatmul.mubr.f32.gmra.mxu0 %v101
    %v196 = vpop.f32.mrf.mxu0
    %v197 = vadd.f32 0.0, %v196
    %v198 = vpop.f32.mrf.mxu0
    %199 = vmatprep.mubr.f32.mxu0 0.0
    %200 = vmatmul.mubr.f32.gmra.mxu0 %v104
    %v201 = vpop.f32.mrf.mxu0
    %v202 = vadd.f32 0.0, %v201
    %v203 = vpop.f32.mrf.mxu0
    %204 = vmatprep.mubr.f32.mxu0 0.0
    %205 = vmatmul.mubr.f32.gmra.mxu0 %v107
    %v206 = vpop.f32.mrf.mxu0
    %v207 = vadd.f32 0.0, %v206
    %v208 = vpop.f32.mrf.mxu0
    %209 = vmatprep.mubr.f32.mxu0 0.0
    %210 = vmatmul.mubr.f32.gmra.mxu0 %v110
    %v211 = vpop.f32.mrf.mxu0
    %v212 = vadd.f32 0.0, %v211
    %v213 = vpop.f32.mrf.mxu0
    %214 = vmatprep.mubr.f32.mxu0 0.0
    %215 = vmatmul.mubr.f32.gmra.mxu0 %v113
    %v216 = vpop.f32.mrf.mxu0
    %v217 = vadd.f32 0.0, %v216
    %v218 = vpop.f32.mrf.mxu0
    %219 = vmatprep.mubr.f32.mxu0 0.0
    %220 = vmatmul.mubr.f32.gmra.mxu0 %v116
    %v221 = vpop.f32.mrf.mxu0
    %v222 = vadd.f32 0.0, %v221
    %v223 = vpop.f32.mrf.mxu0
    %224 = vmatprep.mubr.f32.mxu0 0.0
    %225 = vmatmul.mubr.f32.gmra.mxu0 %v119
    %v226 = vpop.f32.mrf.mxu0
    %v227 = vadd.f32 0.0, %v226
    %v228 = vpop.f32.mrf.mxu0
    %229 = vdwg.mxu0
    %v230 = vld [vmem:[#allocation2 + $0x38] sm:$0xff]
    %v231 = vld [vmem:[#allocation2 + $0x40] sm:$0xff]
    %v232 = vld [vmem:[#allocation2 + $0x48] sm:$0xff]
    %v233 = vld [vmem:[#allocation2 + $0x50] sm:$0xff]
    %vm234 = vcmask 261120
    %v236 = vsel %vm234, 0.0, 0
    %238 = vmatprep.subr.mxu0 0.0
    %239 = vmatpush1.msra.mxu0 0.0
    %240 = vmatprep.subr.mxu0 0.0
    %241 = vmatpush1.msra.mxu0 0.0
    %242 = vmatprep.subr.mxu0 0.0
    %243 = vmatpush1.msra.mxu0 0.0
    %244 = vmatprep.subr.mxu0 0.0
    %245 = vmatpush1.msra.mxu0 0.0
    %246 = vmatprep.subr.mxu0 0.0
    %247 = vmatpush1.msra.mxu0 0.0
    %248 = vmatprep.subr.mxu0 0.0
    %249 = vmatpush1.msra.mxu0 0.0
    %250 = vmatprep.subr.mxu0 0.0
    %251 = vmatpush1.msra.mxu0 0.0
    %252 = vmatprep.subr.mxu0 0.0
    %253 = vmatpush1.msra.mxu0 0.0
    %254 = vmatprep.subr.mxu0 0.0
    %255 = vmatpush1.msra.mxu0 0.0
    %256 = vmatprep.subr.mxu0 0.0
    %257 = vmatpush1.msra.mxu0 0.0
    %258 = vmatprep.subr.mxu0 0.0
    %259 = vmatpush1.msra.mxu0 0.0
    %260 = vmatprep.subr.mxu0 0.0
    %261 = vmatpush1.msra.mxu0 0.0
    %262 = vmatprep.subr.mxu0 0.0
    %263 = vmatpush1.msra.mxu0 %v233
    %264 = vmatprep.subr.mxu0 0.0
    %265 = vmatpush1.msra.mxu0 %v232
    %266 = vmatprep.subr.mxu0 0.0
    %267 = vmatpush1.msra.mxu0 %v231
    %268 = vmatprep.subr.mxu0 0.0
    %269 = vmatpush1.msra.mxu0 %v230
    %270 = vmatprep.subr.mxu0 0.0
    %271 = vmatpush2.msra.mxu0 0.0
    %272 = vmatprep.subr.mxu0 0.0
    %273 = vmatpush2.msra.mxu0 0.0
    %274 = vmatprep.subr.mxu0 0.0
    %275 = vmatpush2.msra.mxu0 0.0
    %276 = vmatprep.subr.mxu0 0.0
    %277 = vmatpush2.msra.mxu0 0.0
    %278 = vmatprep.subr.mxu0 0.0
    %279 = vmatpush2.msra.mxu0 0.0
    %280 = vmatprep.subr.mxu0 0.0
    %281 = vmatpush2.msra.mxu0 0.0
    %282 = vmatprep.subr.mxu0 0.0
    %283 = vmatpush2.msra.mxu0 0.0
    %284 = vmatprep.subr.mxu0 0.0
    %285 = vmatpush2.msra.mxu0 0.0
    %286 = vmatprep.subr.mxu0 0.0
    %287 = vmatpush2.msra.mxu0 0.0
    %288 = vmatprep.subr.mxu0 0.0
    %289 = vmatpush2.msra.mxu0 0.0
    %290 = vmatprep.subr.mxu0 0.0
    %291 = vmatpush2.msra.mxu0 0.0
    %292 = vmatprep.subr.mxu0 0.0
    %293 = vmatpush2.msra.mxu0 0.0
    %294 = vmatprep.subr.mxu0 0.0
    %295 = vmatpush2.msra.mxu0 0.0
    %296 = vmatprep.subr.mxu0 0.0
    %297 = vmatpush2.msra.mxu0 0.0
    %298 = vmatprep.subr.mxu0 0.0
    %299 = vmatpush2.msra.mxu0 0.0
    %300 = vmatprep.subr.mxu0 0.0
    %301 = vmatpush2.msra.mxu0 0.0
    %302 = vmatprep.mubr.f32.mxu0 0.0
    %303 = vmatmul.mubr.f32.gmra.mxu0 %v236
    %v304 = vpop.f32.mrf.mxu0
    %v305 = vadd.f32 0.0, %v304
    %v306 = vpop.f32.mrf.mxu0
    %307 = vdwg.mxu0
    %v308 = vadd.f32 %v192, %v305
    %v309 = vxor.u32 %v308, 2147483648
    %v310 = vmul.f32 %v309, 1.442695
    %v311 = vpow.pop %v310
    %v312 = vadd.f32 %v311, 1.0
    %v313 = vrcp.pop %v312
    %v314 = vmul.f32 1.0, %v313
    %v315 = vtanh.pop %v308
    %v316 = vmul.f32 %v314, 0.0
    %318 = vrot.lane.b32.xlu0 %v315, 64
    %v319 = vpop.permute.xlu0 %318
    %v321 = vmul.f32 %v314, %v319
    %323 = vrot.lane.b32.xlu0 %v321, 32
    %v324 = vpop.permute.xlu0 %323
    %v326 = vadd.f32 %v316, %v324
    %v327 = vtanh.pop %v326
    %329 = vrot.lane.b32.xlu0 %v327, 64
    %v330 = vpop.permute.xlu0 %329
    %v332 = vmul.f32 %v314, %v330
    %vm333 = vcmp.eq.s32.totalorder %v38, 0
    %v334 = vsel %vm333, 1, 0
    %335 = vset.pattern.permute.xlu0 0
    %336 = vperm.xlu0 %335, %v334
    %v337 = vpop.permute.xlu0 %336
    %vm338 = vcmp.eq.s32.totalorder %v337, 1
    %v339 = vsel %vm338, %v332, 0.0
    %341 = vrot.lane.b32.xlu0 %v332, 32
    %v342 = vpop.permute.xlu0 %341
    %v343 = vsel %vm234, %v342, 0
    %345 = vmatprep.subr.mxu0 0.0
    %346 = vmatpush1.msra.mxu0 0.0
    %347 = vmatprep.subr.mxu0 0.0
    %348 = vmatpush1.msra.mxu0 0.0
    %349 = vmatprep.subr.mxu0 0.0
    %350 = vmatpush1.msra.mxu0 0.0
    %351 = vmatprep.subr.mxu0 0.0
    %352 = vmatpush1.msra.mxu0 0.0
    %353 = vmatprep.subr.mxu0 0.0
    %354 = vmatpush1.msra.mxu0 0.0
    %355 = vmatprep.subr.mxu0 0.0
    %356 = vmatpush1.msra.mxu0 0.0
    %357 = vmatprep.subr.mxu0 0.0
    %358 = vmatpush1.msra.mxu0 0.0
    %359 = vmatprep.subr.mxu0 0.0
    %360 = vmatpush1.msra.mxu0 0.0
    %361 = vmatprep.subr.mxu0 0.0
    %362 = vmatpush1.msra.mxu0 0.0
    %363 = vmatprep.subr.mxu0 0.0
    %364 = vmatpush1.msra.mxu0 0.0
    %365 = vmatprep.subr.mxu0 0.0
    %366 = vmatpush1.msra.mxu0 0.0
    %367 = vmatprep.subr.mxu0 0.0
    %368 = vmatpush1.msra.mxu0 0.0
    %369 = vmatprep.subr.mxu0 0.0
    %370 = vmatpush1.msra.mxu0 %v233
    %371 = vmatprep.subr.mxu0 0.0
    %372 = vmatpush1.msra.mxu0 %v232
    %373 = vmatprep.subr.mxu0 0.0
    %374 = vmatpush1.msra.mxu0 %v231
    %375 = vmatprep.subr.mxu0 0.0
    %376 = vmatpush1.msra.mxu0 %v230
    %377 = vmatprep.subr.mxu0 0.0
    %378 = vmatpush2.msra.mxu0 0.0
    %379 = vmatprep.subr.mxu0 0.0
    %380 = vmatpush2.msra.mxu0 0.0
    %381 = vmatprep.subr.mxu0 0.0
    %382 = vmatpush2.msra.mxu0 0.0
    %383 = vmatprep.subr.mxu0 0.0
    %384 = vmatpush2.msra.mxu0 0.0
    %385 = vmatprep.subr.mxu0 0.0
    %386 = vmatpush2.msra.mxu0 0.0
    %387 = vmatprep.subr.mxu0 0.0
    %388 = vmatpush2.msra.mxu0 0.0
    %389 = vmatprep.subr.mxu0 0.0
    %390 = vmatpush2.msra.mxu0 0.0
    %391 = vmatprep.subr.mxu0 0.0
    %392 = vmatpush2.msra.mxu0 0.0
    %393 = vmatprep.subr.mxu0 0.0
    %394 = vmatpush2.msra.mxu0 0.0
    %395 = vmatprep.subr.mxu0 0.0
    %396 = vmatpush2.msra.mxu0 0.0
    %397 = vmatprep.subr.mxu0 0.0
    %398 = vmatpush2.msra.mxu0 0.0
    %399 = vmatprep.subr.mxu0 0.0
    %400 = vmatpush2.msra.mxu0 0.0
    %401 = vmatprep.subr.mxu0 0.0
    %402 = vmatpush2.msra.mxu0 0.0
    %403 = vmatprep.subr.mxu0 0.0
    %404 = vmatpush2.msra.mxu0 0.0
    %405 = vmatprep.subr.mxu0 0.0
    %406 = vmatpush2.msra.mxu0 0.0
    %407 = vmatprep.subr.mxu0 0.0
    %408 = vmatpush2.msra.mxu0 0.0
    %409 = vmatprep.mubr.f32.mxu0 0.0
    %410 = vmatmul.mubr.f32.gmra.mxu0 %v343
    %v411 = vpop.f32.mrf.mxu0
    %v412 = vadd.f32 0.0, %v411
    %v413 = vpop.f32.mrf.mxu0
    %414 = vdwg.mxu0
    %v415 = vadd.f32 %v197, %v412
    %v416 = vxor.u32 %v415, 2147483648
    %v417 = vmul.f32 %v416, 1.442695
    %v418 = vpow.pop %v417
    %v419 = vadd.f32 %v418, 1.0
    %v420 = vrcp.pop %v419
    %v421 = vmul.f32 1.0, %v420
    %v422 = vtanh.pop %v415
    %v423 = vmul.f32 %v421, %v326
    %425 = vrot.lane.b32.xlu0 %v422, 64
    %v426 = vpop.permute.xlu0 %425
    %v428 = vmul.f32 %v421, %v426
    %430 = vrot.lane.b32.xlu0 %v428, 32
    %v431 = vpop.permute.xlu0 %430
    %v433 = vadd.f32 %v423, %v431
    %v434 = vtanh.pop %v433
    %436 = vrot.lane.b32.xlu0 %v434, 64
    %v437 = vpop.permute.xlu0 %436
    %v439 = vmul.f32 %v421, %v437
    %vm440 = vcmp.eq.s32.totalorder %v38, 1
    %v441 = vsel %vm440, 1, 0
    %442 = vset.pattern.permute.xlu0 0
    %443 = vperm.xlu0 %442, %v441
    %v444 = vpop.permute.xlu0 %443
    %vm445 = vcmp.eq.s32.totalorder %v444, 1
    %v446 = vsel %vm445, %v439, %v339
    %448 = vrot.lane.b32.xlu0 %v439, 32
    %v449 = vpop.permute.xlu0 %448
    %v450 = vsel %vm234, %v449, 0
    %452 = vmatprep.subr.mxu0 0.0
    %453 = vmatpush1.msra.mxu0 0.0
    %454 = vmatprep.subr.mxu0 0.0
    %455 = vmatpush1.msra.mxu0 0.0
    %456 = vmatprep.subr.mxu0 0.0
    %457 = vmatpush1.msra.mxu0 0.0
    %458 = vmatprep.subr.mxu0 0.0
    %459 = vmatpush1.msra.mxu0 0.0
    %460 = vmatprep.subr.mxu0 0.0
    %461 = vmatpush1.msra.mxu0 0.0
    %462 = vmatprep.subr.mxu0 0.0
    %463 = vmatpush1.msra.mxu0 0.0
    %464 = vmatprep.subr.mxu0 0.0
    %465 = vmatpush1.msra.mxu0 0.0
    %466 = vmatprep.subr.mxu0 0.0
    %467 = vmatpush1.msra.mxu0 0.0
    %468 = vmatprep.subr.mxu0 0.0
    %469 = vmatpush1.msra.mxu0 0.0
    %470 = vmatprep.subr.mxu0 0.0
    %471 = vmatpush1.msra.mxu0 0.0
    %472 = vmatprep.subr.mxu0 0.0
    %473 = vmatpush1.msra.mxu0 0.0
    %474 = vmatprep.subr.mxu0 0.0
    %475 = vmatpush1.msra.mxu0 0.0
    %476 = vmatprep.subr.mxu0 0.0
    %477 = vmatpush1.msra.mxu0 %v233
    %478 = vmatprep.subr.mxu0 0.0
    %479 = vmatpush1.msra.mxu0 %v232
    %480 = vmatprep.subr.mxu0 0.0
    %481 = vmatpush1.msra.mxu0 %v231
    %482 = vmatprep.subr.mxu0 0.0
    %483 = vmatpush1.msra.mxu0 %v230
    %484 = vmatprep.subr.mxu0 0.0
    %485 = vmatpush2.msra.mxu0 0.0
    %486 = vmatprep.subr.mxu0 0.0
    %487 = vmatpush2.msra.mxu0 0.0
    %488 = vmatprep.subr.mxu0 0.0
    %489 = vmatpush2.msra.mxu0 0.0
    %490 = vmatprep.subr.mxu0 0.0
    %491 = vmatpush2.msra.mxu0 0.0
    %492 = vmatprep.subr.mxu0 0.0
    %493 = vmatpush2.msra.mxu0 0.0
    %494 = vmatprep.subr.mxu0 0.0
    %495 = vmatpush2.msra.mxu0 0.0
    %496 = vmatprep.subr.mxu0 0.0
    %497 = vmatpush2.msra.mxu0 0.0
    %498 = vmatprep.subr.mxu0 0.0
    %499 = vmatpush2.msra.mxu0 0.0
    %500 = vmatprep.subr.mxu0 0.0
    %501 = vmatpush2.msra.mxu0 0.0
    %502 = vmatprep.subr.mxu0 0.0
    %503 = vmatpush2.msra.mxu0 0.0
    %504 = vmatprep.subr.mxu0 0.0
    %505 = vmatpush2.msra.mxu0 0.0
    %506 = vmatprep.subr.mxu0 0.0
    %507 = vmatpush2.msra.mxu0 0.0
    %508 = vmatprep.subr.mxu0 0.0
    %509 = vmatpush2.msra.mxu0 0.0
    %510 = vmatprep.subr.mxu0 0.0
    %511 = vmatpush2.msra.mxu0 0.0
    %512 = vmatprep.subr.mxu0 0.0
    %513 = vmatpush2.msra.mxu0 0.0
    %514 = vmatprep.subr.mxu0 0.0
    %515 = vmatpush2.msra.mxu0 0.0
    %516 = vmatprep.mubr.f32.mxu0 0.0
    %517 = vmatmul.mubr.f32.gmra.mxu0 %v450
    %v518 = vpop.f32.mrf.mxu0
    %v519 = vadd.f32 0.0, %v518
    %v520 = vpop.f32.mrf.mxu0
    %521 = vdwg.mxu0
    %v522 = vadd.f32 %v202, %v519
    %v523 = vxor.u32 %v522, 2147483648
    %v524 = vmul.f32 %v523, 1.442695
    %v525 = vpow.pop %v524
    %v526 = vadd.f32 %v525, 1.0
    %v527 = vrcp.pop %v526
    %v528 = vmul.f32 1.0, %v527
    %v529 = vtanh.pop %v522
    %v530 = vmul.f32 %v528, %v433
    %532 = vrot.lane.b32.xlu0 %v529, 64
    %v533 = vpop.permute.xlu0 %532
    %v535 = vmul.f32 %v528, %v533
    %537 = vrot.lane.b32.xlu0 %v535, 32
    %v538 = vpop.permute.xlu0 %537
    %v540 = vadd.f32 %v530, %v538
    %v541 = vtanh.pop %v540
    %543 = vrot.lane.b32.xlu0 %v541, 64
    %v544 = vpop.permute.xlu0 %543
    %v546 = vmul.f32 %v528, %v544
    %vm547 = vcmp.eq.s32.totalorder %v38, 2
    %v548 = vsel %vm547, 1, 0
    %549 = vset.pattern.permute.xlu0 0
    %550 = vperm.xlu0 %549, %v548
    %v551 = vpop.permute.xlu0 %550
    %vm552 = vcmp.eq.s32.totalorder %v551, 1
    %v553 = vsel %vm552, %v546, %v446
    %555 = vrot.lane.b32.xlu0 %v546, 32
    %v556 = vpop.permute.xlu0 %555
    %v557 = vsel %vm234, %v556, 0
    %559 = vmatprep.subr.mxu0 0.0
    %560 = vmatpush1.msra.mxu0 0.0
    %561 = vmatprep.subr.mxu0 0.0
    %562 = vmatpush1.msra.mxu0 0.0
    %563 = vmatprep.subr.mxu0 0.0
    %564 = vmatpush1.msra.mxu0 0.0
    %565 = vmatprep.subr.mxu0 0.0
    %566 = vmatpush1.msra.mxu0 0.0
    %567 = vmatprep.subr.mxu0 0.0
    %568 = vmatpush1.msra.mxu0 0.0
    %569 = vmatprep.subr.mxu0 0.0
    %570 = vmatpush1.msra.mxu0 0.0
    %571 = vmatprep.subr.mxu0 0.0
    %572 = vmatpush1.msra.mxu0 0.0
    %573 = vmatprep.subr.mxu0 0.0
    %574 = vmatpush1.msra.mxu0 0.0
    %575 = vmatprep.subr.mxu0 0.0
    %576 = vmatpush1.msra.mxu0 0.0
    %577 = vmatprep.subr.mxu0 0.0
    %578 = vmatpush1.msra.mxu0 0.0
    %579 = vmatprep.subr.mxu0 0.0
    %580 = vmatpush1.msra.mxu0 0.0
    %581 = vmatprep.subr.mxu0 0.0
    %582 = vmatpush1.msra.mxu0 0.0
    %583 = vmatprep.subr.mxu0 0.0
    %584 = vmatpush1.msra.mxu0 %v233
    %585 = vmatprep.subr.mxu0 0.0
    %586 = vmatpush1.msra.mxu0 %v232
    %587 = vmatprep.subr.mxu0 0.0
    %588 = vmatpush1.msra.mxu0 %v231
    %589 = vmatprep.subr.mxu0 0.0
    %590 = vmatpush1.msra.mxu0 %v230
    %591 = vmatprep.subr.mxu0 0.0
    %592 = vmatpush2.msra.mxu0 0.0
    %593 = vmatprep.subr.mxu0 0.0
    %594 = vmatpush2.msra.mxu0 0.0
    %595 = vmatprep.subr.mxu0 0.0
    %596 = vmatpush2.msra.mxu0 0.0
    %597 = vmatprep.subr.mxu0 0.0
    %598 = vmatpush2.msra.mxu0 0.0
    %599 = vmatprep.subr.mxu0 0.0
    %600 = vmatpush2.msra.mxu0 0.0
    %601 = vmatprep.subr.mxu0 0.0
    %602 = vmatpush2.msra.mxu0 0.0
    %603 = vmatprep.subr.mxu0 0.0
    %604 = vmatpush2.msra.mxu0 0.0
    %605 = vmatprep.subr.mxu0 0.0
    %606 = vmatpush2.msra.mxu0 0.0
    %607 = vmatprep.subr.mxu0 0.0
    %608 = vmatpush2.msra.mxu0 0.0
    %609 = vmatprep.subr.mxu0 0.0
    %610 = vmatpush2.msra.mxu0 0.0
    %611 = vmatprep.subr.mxu0 0.0
    %612 = vmatpush2.msra.mxu0 0.0
    %613 = vmatprep.subr.mxu0 0.0
    %614 = vmatpush2.msra.mxu0 0.0
    %615 = vmatprep.subr.mxu0 0.0
    %616 = vmatpush2.msra.mxu0 0.0
    %617 = vmatprep.subr.mxu0 0.0
    %618 = vmatpush2.msra.mxu0 0.0
    %619 = vmatprep.subr.mxu0 0.0
    %620 = vmatpush2.msra.mxu0 0.0
    %621 = vmatprep.subr.mxu0 0.0
    %622 = vmatpush2.msra.mxu0 0.0
    %623 = vmatprep.mubr.f32.mxu0 0.0
    %624 = vmatmul.mubr.f32.gmra.mxu0 %v557
    %v625 = vpop.f32.mrf.mxu0
    %v626 = vadd.f32 0.0, %v625
    %v627 = vpop.f32.mrf.mxu0
    %628 = vdwg.mxu0
    %v629 = vadd.f32 %v207, %v626
    %v630 = vxor.u32 %v629, 2147483648
    %v631 = vmul.f32 %v630, 1.442695
    %v632 = vpow.pop %v631
    %v633 = vadd.f32 %v632, 1.0
    %v634 = vrcp.pop %v633
    %v635 = vmul.f32 1.0, %v634
    %v636 = vtanh.pop %v629
    %v637 = vmul.f32 %v635, %v540
    %639 = vrot.lane.b32.xlu0 %v636, 64
    %v640 = vpop.permute.xlu0 %639
    %v642 = vmul.f32 %v635, %v640
    %644 = vrot.lane.b32.xlu0 %v642, 32
    %v645 = vpop.permute.xlu0 %644
    %v647 = vadd.f32 %v637, %v645
    %v648 = vtanh.pop %v647
    %650 = vrot.lane.b32.xlu0 %v648, 64
    %v651 = vpop.permute.xlu0 %650
    %v653 = vmul.f32 %v635, %v651
    %vm654 = vcmp.eq.s32.totalorder %v38, 3
    %v655 = vsel %vm654, 1, 0
    %656 = vset.pattern.permute.xlu0 0
    %657 = vperm.xlu0 %656, %v655
    %v658 = vpop.permute.xlu0 %657
    %vm659 = vcmp.eq.s32.totalorder %v658, 1
    %v660 = vsel %vm659, %v653, %v553
    %662 = vrot.lane.b32.xlu0 %v653, 32
    %v663 = vpop.permute.xlu0 %662
    %v664 = vsel %vm234, %v663, 0
    %666 = vmatprep.subr.mxu0 0.0
    %667 = vmatpush1.msra.mxu0 0.0
    %668 = vmatprep.subr.mxu0 0.0
    %669 = vmatpush1.msra.mxu0 0.0
    %670 = vmatprep.subr.mxu0 0.0
    %671 = vmatpush1.msra.mxu0 0.0
    %672 = vmatprep.subr.mxu0 0.0
    %673 = vmatpush1.msra.mxu0 0.0
    %674 = vmatprep.subr.mxu0 0.0
    %675 = vmatpush1.msra.mxu0 0.0
    %676 = vmatprep.subr.mxu0 0.0
    %677 = vmatpush1.msra.mxu0 0.0
    %678 = vmatprep.subr.mxu0 0.0
    %679 = vmatpush1.msra.mxu0 0.0
    %680 = vmatprep.subr.mxu0 0.0
    %681 = vmatpush1.msra.mxu0 0.0
    %682 = vmatprep.subr.mxu0 0.0
    %683 = vmatpush1.msra.mxu0 0.0
    %684 = vmatprep.subr.mxu0 0.0
    %685 = vmatpush1.msra.mxu0 0.0
    %686 = vmatprep.subr.mxu0 0.0
    %687 = vmatpush1.msra.mxu0 0.0
    %688 = vmatprep.subr.mxu0 0.0
    %689 = vmatpush1.msra.mxu0 0.0
    %690 = vmatprep.subr.mxu0 0.0
    %691 = vmatpush1.msra.mxu0 %v233
    %692 = vmatprep.subr.mxu0 0.0
    %693 = vmatpush1.msra.mxu0 %v232
    %694 = vmatprep.subr.mxu0 0.0
    %695 = vmatpush1.msra.mxu0 %v231
    %696 = vmatprep.subr.mxu0 0.0
    %697 = vmatpush1.msra.mxu0 %v230
    %698 = vmatprep.subr.mxu0 0.0
    %699 = vmatpush2.msra.mxu0 0.0
    %700 = vmatprep.subr.mxu0 0.0
    %701 = vmatpush2.msra.mxu0 0.0
    %702 = vmatprep.subr.mxu0 0.0
    %703 = vmatpush2.msra.mxu0 0.0
    %704 = vmatprep.subr.mxu0 0.0
    %705 = vmatpush2.msra.mxu0 0.0
    %706 = vmatprep.subr.mxu0 0.0
    %707 = vmatpush2.msra.mxu0 0.0
    %708 = vmatprep.subr.mxu0 0.0
    %709 = vmatpush2.msra.mxu0 0.0
    %710 = vmatprep.subr.mxu0 0.0
    %711 = vmatpush2.msra.mxu0 0.0
    %712 = vmatprep.subr.mxu0 0.0
    %713 = vmatpush2.msra.mxu0 0.0
    %714 = vmatprep.subr.mxu0 0.0
    %715 = vmatpush2.msra.mxu0 0.0
    %716 = vmatprep.subr.mxu0 0.0
    %717 = vmatpush2.msra.mxu0 0.0
    %718 = vmatprep.subr.mxu0 0.0
    %719 = vmatpush2.msra.mxu0 0.0
    %720 = vmatprep.subr.mxu0 0.0
    %721 = vmatpush2.msra.mxu0 0.0
    %722 = vmatprep.subr.mxu0 0.0
    %723 = vmatpush2.msra.mxu0 0.0
    %724 = vmatprep.subr.mxu0 0.0
    %725 = vmatpush2.msra.mxu0 0.0
    %726 = vmatprep.subr.mxu0 0.0
    %727 = vmatpush2.msra.mxu0 0.0
    %728 = vmatprep.subr.mxu0 0.0
    %729 = vmatpush2.msra.mxu0 0.0
    %730 = vmatprep.mubr.f32.mxu0 0.0
    %731 = vmatmul.mubr.f32.gmra.mxu0 %v664
    %v732 = vpop.f32.mrf.mxu0
    %v733 = vadd.f32 0.0, %v732
    %v734 = vpop.f32.mrf.mxu0
    %735 = vdwg.mxu0
    %v736 = vadd.f32 %v212, %v733
    %v737 = vxor.u32 %v736, 2147483648
    %v738 = vmul.f32 %v737, 1.442695
    %v739 = vpow.pop %v738
    %v740 = vadd.f32 %v739, 1.0
    %v741 = vrcp.pop %v740
    %v742 = vmul.f32 1.0, %v741
    %v743 = vtanh.pop %v736
    %v744 = vmul.f32 %v742, %v647
    %746 = vrot.lane.b32.xlu0 %v743, 64
    %v747 = vpop.permute.xlu0 %746
    %v749 = vmul.f32 %v742, %v747
    %751 = vrot.lane.b32.xlu0 %v749, 32
    %v752 = vpop.permute.xlu0 %751
    %v754 = vadd.f32 %v744, %v752
    %v755 = vtanh.pop %v754
    %757 = vrot.lane.b32.xlu0 %v755, 64
    %v758 = vpop.permute.xlu0 %757
    %v760 = vmul.f32 %v742, %v758
    %vm761 = vcmp.eq.s32.totalorder %v38, 4
    %v762 = vsel %vm761, 1, 0
    %763 = vset.pattern.permute.xlu0 0
    %764 = vperm.xlu0 %763, %v762
    %v765 = vpop.permute.xlu0 %764
    %vm766 = vcmp.eq.s32.totalorder %v765, 1
    %v767 = vsel %vm766, %v760, %v660
    %769 = vrot.lane.b32.xlu0 %v760, 32
    %v770 = vpop.permute.xlu0 %769
    %v771 = vsel %vm234, %v770, 0
    %773 = vmatprep.subr.mxu0 0.0
    %774 = vmatpush1.msra.mxu0 0.0
    %775 = vmatprep.subr.mxu0 0.0
    %776 = vmatpush1.msra.mxu0 0.0
    %777 = vmatprep.subr.mxu0 0.0
    %778 = vmatpush1.msra.mxu0 0.0
    %779 = vmatprep.subr.mxu0 0.0
    %780 = vmatpush1.msra.mxu0 0.0
    %781 = vmatprep.subr.mxu0 0.0
    %782 = vmatpush1.msra.mxu0 0.0
    %783 = vmatprep.subr.mxu0 0.0
    %784 = vmatpush1.msra.mxu0 0.0
    %785 = vmatprep.subr.mxu0 0.0
    %786 = vmatpush1.msra.mxu0 0.0
    %787 = vmatprep.subr.mxu0 0.0
    %788 = vmatpush1.msra.mxu0 0.0
    %789 = vmatprep.subr.mxu0 0.0
    %790 = vmatpush1.msra.mxu0 0.0
    %791 = vmatprep.subr.mxu0 0.0
    %792 = vmatpush1.msra.mxu0 0.0
    %793 = vmatprep.subr.mxu0 0.0
    %794 = vmatpush1.msra.mxu0 0.0
    %795 = vmatprep.subr.mxu0 0.0
    %796 = vmatpush1.msra.mxu0 0.0
    %797 = vmatprep.subr.mxu0 0.0
    %798 = vmatpush1.msra.mxu0 %v233
    %799 = vmatprep.subr.mxu0 0.0
    %800 = vmatpush1.msra.mxu0 %v232
    %801 = vmatprep.subr.mxu0 0.0
    %802 = vmatpush1.msra.mxu0 %v231
    %803 = vmatprep.subr.mxu0 0.0
    %804 = vmatpush1.msra.mxu0 %v230
    %805 = vmatprep.subr.mxu0 0.0
    %806 = vmatpush2.msra.mxu0 0.0
    %807 = vmatprep.subr.mxu0 0.0
    %808 = vmatpush2.msra.mxu0 0.0
    %809 = vmatprep.subr.mxu0 0.0
    %810 = vmatpush2.msra.mxu0 0.0
    %811 = vmatprep.subr.mxu0 0.0
    %812 = vmatpush2.msra.mxu0 0.0
    %813 = vmatprep.subr.mxu0 0.0
    %814 = vmatpush2.msra.mxu0 0.0
    %815 = vmatprep.subr.mxu0 0.0
    %816 = vmatpush2.msra.mxu0 0.0
    %817 = vmatprep.subr.mxu0 0.0
    %818 = vmatpush2.msra.mxu0 0.0
    %819 = vmatprep.subr.mxu0 0.0
    %820 = vmatpush2.msra.mxu0 0.0
    %821 = vmatprep.subr.mxu0 0.0
    %822 = vmatpush2.msra.mxu0 0.0
    %823 = vmatprep.subr.mxu0 0.0
    %824 = vmatpush2.msra.mxu0 0.0
    %825 = vmatprep.subr.mxu0 0.0
    %826 = vmatpush2.msra.mxu0 0.0
    %827 = vmatprep.subr.mxu0 0.0
    %828 = vmatpush2.msra.mxu0 0.0
    %829 = vmatprep.subr.mxu0 0.0
    %830 = vmatpush2.msra.mxu0 0.0
    %831 = vmatprep.subr.mxu0 0.0
    %832 = vmatpush2.msra.mxu0 0.0
    %833 = vmatprep.subr.mxu0 0.0
    %834 = vmatpush2.msra.mxu0 0.0
    %835 = vmatprep.subr.mxu0 0.0
    %836 = vmatpush2.msra.mxu0 0.0
    %837 = vmatprep.mubr.f32.mxu0 0.0
    %838 = vmatmul.mubr.f32.gmra.mxu0 %v771
    %v839 = vpop.f32.mrf.mxu0
    %v840 = vadd.f32 0.0, %v839
    %v841 = vpop.f32.mrf.mxu0
    %842 = vdwg.mxu0
    %v843 = vadd.f32 %v217, %v840
    %v844 = vxor.u32 %v843, 2147483648
    %v845 = vmul.f32 %v844, 1.442695
    %v846 = vpow.pop %v845
    %v847 = vadd.f32 %v846, 1.0
    %v848 = vrcp.pop %v847
    %v849 = vmul.f32 1.0, %v848
    %v850 = vtanh.pop %v843
    %v851 = vmul.f32 %v849, %v754
    %853 = vrot.lane.b32.xlu0 %v850, 64
    %v854 = vpop.permute.xlu0 %853
    %v856 = vmul.f32 %v849, %v854
    %858 = vrot.lane.b32.xlu0 %v856, 32
    %v859 = vpop.permute.xlu0 %858
    %v861 = vadd.f32 %v851, %v859
    %v862 = vtanh.pop %v861
    %864 = vrot.lane.b32.xlu0 %v862, 64
    %v865 = vpop.permute.xlu0 %864
    %v867 = vmul.f32 %v849, %v865
    %vm868 = vcmp.eq.s32.totalorder %v38, 5
    %v869 = vsel %vm868, 1, 0
    %870 = vset.pattern.permute.xlu0 0
    %871 = vperm.xlu0 %870, %v869
    %v872 = vpop.permute.xlu0 %871
    %vm873 = vcmp.eq.s32.totalorder %v872, 1
    %v874 = vsel %vm873, %v867, %v767
    %876 = vrot.lane.b32.xlu0 %v867, 32
    %v877 = vpop.permute.xlu0 %876
    %v878 = vsel %vm234, %v877, 0
    %880 = vmatprep.subr.mxu0 0.0
    %881 = vmatpush1.msra.mxu0 0.0
    %882 = vmatprep.subr.mxu0 0.0
    %883 = vmatpush1.msra.mxu0 0.0
    %884 = vmatprep.subr.mxu0 0.0
    %885 = vmatpush1.msra.mxu0 0.0
    %886 = vmatprep.subr.mxu0 0.0
    %887 = vmatpush1.msra.mxu0 0.0
    %888 = vmatprep.subr.mxu0 0.0
    %889 = vmatpush1.msra.mxu0 0.0
    %890 = vmatprep.subr.mxu0 0.0
    %891 = vmatpush1.msra.mxu0 0.0
    %892 = vmatprep.subr.mxu0 0.0
    %893 = vmatpush1.msra.mxu0 0.0
    %894 = vmatprep.subr.mxu0 0.0
    %895 = vmatpush1.msra.mxu0 0.0
    %896 = vmatprep.subr.mxu0 0.0
    %897 = vmatpush1.msra.mxu0 0.0
    %898 = vmatprep.subr.mxu0 0.0
    %899 = vmatpush1.msra.mxu0 0.0
    %900 = vmatprep.subr.mxu0 0.0
    %901 = vmatpush1.msra.mxu0 0.0
    %902 = vmatprep.subr.mxu0 0.0
    %903 = vmatpush1.msra.mxu0 0.0
    %904 = vmatprep.subr.mxu0 0.0
    %905 = vmatpush1.msra.mxu0 %v233
    %906 = vmatprep.subr.mxu0 0.0
    %907 = vmatpush1.msra.mxu0 %v232
    %908 = vmatprep.subr.mxu0 0.0
    %909 = vmatpush1.msra.mxu0 %v231
    %910 = vmatprep.subr.mxu0 0.0
    %911 = vmatpush1.msra.mxu0 %v230
    %912 = vmatprep.subr.mxu0 0.0
    %913 = vmatpush2.msra.mxu0 0.0
    %914 = vmatprep.subr.mxu0 0.0
    %915 = vmatpush2.msra.mxu0 0.0
    %916 = vmatprep.subr.mxu0 0.0
    %917 = vmatpush2.msra.mxu0 0.0
    %918 = vmatprep.subr.mxu0 0.0
    %919 = vmatpush2.msra.mxu0 0.0
    %920 = vmatprep.subr.mxu0 0.0
    %921 = vmatpush2.msra.mxu0 0.0
    %922 = vmatprep.subr.mxu0 0.0
    %923 = vmatpush2.msra.mxu0 0.0
    %924 = vmatprep.subr.mxu0 0.0
    %925 = vmatpush2.msra.mxu0 0.0
    %926 = vmatprep.subr.mxu0 0.0
    %927 = vmatpush2.msra.mxu0 0.0
    %928 = vmatprep.subr.mxu0 0.0
    %929 = vmatpush2.msra.mxu0 0.0
    %930 = vmatprep.subr.mxu0 0.0
    %931 = vmatpush2.msra.mxu0 0.0
    %932 = vmatprep.subr.mxu0 0.0
    %933 = vmatpush2.msra.mxu0 0.0
    %934 = vmatprep.subr.mxu0 0.0
    %935 = vmatpush2.msra.mxu0 0.0
    %936 = vmatprep.subr.mxu0 0.0
    %937 = vmatpush2.msra.mxu0 0.0
    %938 = vmatprep.subr.mxu0 0.0
    %939 = vmatpush2.msra.mxu0 0.0
    %940 = vmatprep.subr.mxu0 0.0
    %941 = vmatpush2.msra.mxu0 0.0
    %942 = vmatprep.subr.mxu0 0.0
    %943 = vmatpush2.msra.mxu0 0.0
    %944 = vmatprep.mubr.f32.mxu0 0.0
    %945 = vmatmul.mubr.f32.gmra.mxu0 %v878
    %v946 = vpop.f32.mrf.mxu0
    %v947 = vadd.f32 0.0, %v946
    %v948 = vpop.f32.mrf.mxu0
    %949 = vdwg.mxu0
    %v950 = vadd.f32 %v222, %v947
    %v951 = vxor.u32 %v950, 2147483648
    %v952 = vmul.f32 %v951, 1.442695
    %v953 = vpow.pop %v952
    %v954 = vadd.f32 %v953, 1.0
    %v955 = vrcp.pop %v954
    %v956 = vmul.f32 1.0, %v955
    %v957 = vtanh.pop %v950
    %v958 = vmul.f32 %v956, %v861
    %960 = vrot.lane.b32.xlu0 %v957, 64
    %v961 = vpop.permute.xlu0 %960
    %v963 = vmul.f32 %v956, %v961
    %965 = vrot.lane.b32.xlu0 %v963, 32
    %v966 = vpop.permute.xlu0 %965
    %v968 = vadd.f32 %v958, %v966
    %v969 = vtanh.pop %v968
    %971 = vrot.lane.b32.xlu0 %v969, 64
    %v972 = vpop.permute.xlu0 %971
    %v974 = vmul.f32 %v956, %v972
    %vm975 = vcmp.eq.s32.totalorder %v38, 6
    %v976 = vsel %vm975, 1, 0
    %977 = vset.pattern.permute.xlu0 0
    %978 = vperm.xlu0 %977, %v976
    %v979 = vpop.permute.xlu0 %978
    %vm980 = vcmp.eq.s32.totalorder %v979, 1
    %v981 = vsel %vm980, %v974, %v874
    %983 = vrot.lane.b32.xlu0 %v974, 32
    %v984 = vpop.permute.xlu0 %983
    %v985 = vsel %vm234, %v984, 0
    %987 = vmatprep.subr.mxu0 0.0
    %988 = vmatpush1.msra.mxu0 0.0
    %989 = vmatprep.subr.mxu0 0.0
    %990 = vmatpush1.msra.mxu0 0.0
    %991 = vmatprep.subr.mxu0 0.0
    %992 = vmatpush1.msra.mxu0 0.0
    %993 = vmatprep.subr.mxu0 0.0
    %994 = vmatpush1.msra.mxu0 0.0
    %995 = vmatprep.subr.mxu0 0.0
    %996 = vmatpush1.msra.mxu0 0.0
    %997 = vmatprep.subr.mxu0 0.0
    %998 = vmatpush1.msra.mxu0 0.0
    %999 = vmatprep.subr.mxu0 0.0
    %1000 = vmatpush1.msra.mxu0 0.0
    %1001 = vmatprep.subr.mxu0 0.0
    %1002 = vmatpush1.msra.mxu0 0.0
    %1003 = vmatprep.subr.mxu0 0.0
    %1004 = vmatpush1.msra.mxu0 0.0
    %1005 = vmatprep.subr.mxu0 0.0
    %1006 = vmatpush1.msra.mxu0 0.0
    %1007 = vmatprep.subr.mxu0 0.0
    %1008 = vmatpush1.msra.mxu0 0.0
    %1009 = vmatprep.subr.mxu0 0.0
    %1010 = vmatpush1.msra.mxu0 0.0
    %1011 = vmatprep.subr.mxu0 0.0
    %1012 = vmatpush1.msra.mxu0 %v233
    %1013 = vmatprep.subr.mxu0 0.0
    %1014 = vmatpush1.msra.mxu0 %v232
    %1015 = vmatprep.subr.mxu0 0.0
    %1016 = vmatpush1.msra.mxu0 %v231
    %1017 = vmatprep.subr.mxu0 0.0
    %1018 = vmatpush1.msra.mxu0 %v230
    %1019 = vmatprep.subr.mxu0 0.0
    %1020 = vmatpush2.msra.mxu0 0.0
    %1021 = vmatprep.subr.mxu0 0.0
    %1022 = vmatpush2.msra.mxu0 0.0
    %1023 = vmatprep.subr.mxu0 0.0
    %1024 = vmatpush2.msra.mxu0 0.0
    %1025 = vmatprep.subr.mxu0 0.0
    %1026 = vmatpush2.msra.mxu0 0.0
    %1027 = vmatprep.subr.mxu0 0.0
    %1028 = vmatpush2.msra.mxu0 0.0
    %1029 = vmatprep.subr.mxu0 0.0
    %1030 = vmatpush2.msra.mxu0 0.0
    %1031 = vmatprep.subr.mxu0 0.0
    %1032 = vmatpush2.msra.mxu0 0.0
    %1033 = vmatprep.subr.mxu0 0.0
    %1034 = vmatpush2.msra.mxu0 0.0
    %1035 = vmatprep.subr.mxu0 0.0
    %1036 = vmatpush2.msra.mxu0 0.0
    %1037 = vmatprep.subr.mxu0 0.0
    %1038 = vmatpush2.msra.mxu0 0.0
    %1039 = vmatprep.subr.mxu0 0.0
    %1040 = vmatpush2.msra.mxu0 0.0
    %1041 = vmatprep.subr.mxu0 0.0
    %1042 = vmatpush2.msra.mxu0 0.0
    %1043 = vmatprep.subr.mxu0 0.0
    %1044 = vmatpush2.msra.mxu0 0.0
    %1045 = vmatprep.subr.mxu0 0.0
    %1046 = vmatpush2.msra.mxu0 0.0
    %1047 = vmatprep.subr.mxu0 0.0
    %1048 = vmatpush2.msra.mxu0 0.0
    %1049 = vmatprep.subr.mxu0 0.0
    %1050 = vmatpush2.msra.mxu0 0.0
    %1051 = vmatprep.mubr.f32.mxu0 0.0
    %1052 = vmatmul.mubr.f32.gmra.mxu0 %v985
    %v1053 = vpop.f32.mrf.mxu0
    %v1054 = vadd.f32 0.0, %v1053
    %v1055 = vpop.f32.mrf.mxu0
    %1056 = vdwg.mxu0
    %v1057 = vadd.f32 %v227, %v1054
    %v1058 = vxor.u32 %v1057, 2147483648
    %v1059 = vmul.f32 %v1058, 1.442695
    %v1060 = vpow.pop %v1059
    %v1061 = vadd.f32 %v1060, 1.0
    %v1062 = vrcp.pop %v1061
    %v1063 = vmul.f32 1.0, %v1062
    %v1064 = vtanh.pop %v1057
    %v1065 = vmul.f32 %v1063, %v968
    %1067 = vrot.lane.b32.xlu0 %v1064, 64
    %v1068 = vpop.permute.xlu0 %1067
    %v1070 = vmul.f32 %v1063, %v1068
    %1072 = vrot.lane.b32.xlu0 %v1070, 32
    %v1073 = vpop.permute.xlu0 %1072
    %v1075 = vadd.f32 %v1065, %v1073
    %v1076 = vtanh.pop %v1075
    %1078 = vrot.lane.b32.xlu0 %v1076, 64
    %v1079 = vpop.permute.xlu0 %1078
    %v1081 = vmul.f32 %v1063, %v1079
    %vm1082 = vcmp.eq.s32.totalorder %v38, 7
    %v1083 = vsel %vm1082, 1, 0
    %1084 = vset.pattern.permute.xlu0 0
    %1085 = vperm.xlu0 %1084, %v1083
    %v1086 = vpop.permute.xlu0 %1085
    %vm1087 = vcmp.eq.s32.totalorder %v1086, 1
    %v1088 = vsel %vm1087, %v1081, %v981
    %v1089 = vld [vmem:[#allocation2 + $0x58] sm:$0xff]
    %v1090 = vld [vmem:[#allocation2 + $0x60] sm:$0xff]
    %v1091 = vld [vmem:[#allocation2 + $0x68] sm:$0xff]
    %v1092 = vld [vmem:[#allocation2 + $0x70] sm:$0xff]
    %v1093 = vld [vmem:[#allocation2 + $0xb8] sm:$0x1]
    %v1094 = vlaneseq
    %v1095 = vshrl.u32 %v1094, 7
    %v1096 = vsub.s32 0, %v1095
    %v1097 = vrot.slane %v1093, %v1096
    %1099 = vrot.lane.b32.xlu0 %v1088, 32
    %v1100 = vpop.permute.xlu0 %1099
    %v1101 = vsel %vm234, %v1100, 0
    %1103 = vmatprep.subr.mxu0 0.0
    %1104 = vmatpush1.msra.mxu0 0.0
    %1105 = vmatprep.subr.mxu0 0.0
    %1106 = vmatpush1.msra.mxu0 0.0
    %1107 = vmatprep.subr.mxu0 0.0
    %1108 = vmatpush1.msra.mxu0 0.0
    %1109 = vmatprep.subr.mxu0 0.0
    %1110 = vmatpush1.msra.mxu0 0.0
    %1111 = vmatprep.subr.mxu0 0.0
    %1112 = vmatpush1.msra.mxu0 0.0
    %1113 = vmatprep.subr.mxu0 0.0
    %1114 = vmatpush1.msra.mxu0 0.0
    %1115 = vmatprep.subr.mxu0 0.0
    %1116 = vmatpush1.msra.mxu0 0.0
    %1117 = vmatprep.subr.mxu0 0.0
    %1118 = vmatpush1.msra.mxu0 0.0
    %1119 = vmatprep.subr.mxu0 0.0
    %1120 = vmatpush1.msra.mxu0 0.0
    %1121 = vmatprep.subr.mxu0 0.0
    %1122 = vmatpush1.msra.mxu0 0.0
    %1123 = vmatprep.subr.mxu0 0.0
    %1124 = vmatpush1.msra.mxu0 0.0
    %1125 = vmatprep.subr.mxu0 0.0
    %1126 = vmatpush1.msra.mxu0 0.0
    %1127 = vmatprep.subr.mxu0 0.0
    %1128 = vmatpush1.msra.mxu0 %v1092
    %1129 = vmatprep.subr.mxu0 0.0
    %1130 = vmatpush1.msra.mxu0 %v1091
    %1131 = vmatprep.subr.mxu0 0.0
    %1132 = vmatpush1.msra.mxu0 %v1090
    %1133 = vmatprep.subr.mxu0 0.0
    %1134 = vmatpush1.msra.mxu0 %v1089
    %1135 = vmatprep.subr.mxu0 0.0
    %1136 = vmatpush2.msra.mxu0 0.0
    %1137 = vmatprep.subr.mxu0 0.0
    %1138 = vmatpush2.msra.mxu0 0.0
    %1139 = vmatprep.subr.mxu0 0.0
    %1140 = vmatpush2.msra.mxu0 0.0
    %1141 = vmatprep.subr.mxu0 0.0
    %1142 = vmatpush2.msra.mxu0 0.0
    %1143 = vmatprep.subr.mxu0 0.0
    %1144 = vmatpush2.msra.mxu0 0.0
    %1145 = vmatprep.subr.mxu0 0.0
    %1146 = vmatpush2.msra.mxu0 0.0
    %1147 = vmatprep.subr.mxu0 0.0
    %1148 = vmatpush2.msra.mxu0 0.0
    %1149 = vmatprep.subr.mxu0 0.0
    %1150 = vmatpush2.msra.mxu0 0.0
    %1151 = vmatprep.subr.mxu0 0.0
    %1152 = vmatpush2.msra.mxu0 0.0
    %1153 = vmatprep.subr.mxu0 0.0
    %1154 = vmatpush2.msra.mxu0 0.0
    %1155 = vmatprep.subr.mxu0 0.0
    %1156 = vmatpush2.msra.mxu0 0.0
    %1157 = vmatprep.subr.mxu0 0.0
    %1158 = vmatpush2.msra.mxu0 0.0
    %1159 = vmatprep.subr.mxu0 0.0
    %1160 = vmatpush2.msra.mxu0 0.0
    %1161 = vmatprep.subr.mxu0 0.0
    %1162 = vmatpush2.msra.mxu0 0.0
    %1163 = vmatprep.subr.mxu0 0.0
    %1164 = vmatpush2.msra.mxu0 0.0
    %1165 = vmatprep.subr.mxu0 0.0
    %1166 = vmatpush2.msra.mxu0 0.0
    %1167 = vmatprep.mubr.f32.mxu0 0.0
    %1168 = vmatmul.mubr.f32.gmra.mxu0 %v1101
    %v1169 = vpop.f32.mrf.mxu0
    %v1170 = vadd.f32 %v1097, %v1169
    %v1171 = vpop.f32.mrf.mxu0
    %1172 = vdwg.mxu0
    %v1173 = vld [vmem:[%s1] sm:$0xff]
    %v1174 = vld [vmem:[#allocation2 + $0x78] sm:$0xff]
    %v1175 = vld [vmem:[#allocation2 + $0x80] sm:$0xff]
    %v1176 = vld [vmem:[#allocation2 + $0x88] sm:$0xff]
    %v1177 = vld [vmem:[#allocation2 + $0x90] sm:$0xff]
    %v1178 = vld [vmem:[#allocation2 + $0x98] sm:$0xff]
    %v1179 = vld [vmem:[#allocation2 + $0xa0] sm:$0xff]
    %v1180 = vld [vmem:[#allocation2 + $0xa8] sm:$0xff]
    %v1181 = vld [vmem:[#allocation2 + $0xb0] sm:$0xff]
    %v1182 = vld [vmem:[#allocation2 + $0xc0] sm:$0x1]
    %v1183 = vlaneseq
    %v1184 = vshrl.u32 %v1183, 7
    %v1185 = vsub.s32 0, %v1184
    %v1186 = vrot.slane %v1182, %v1185
    %vm1187 = vcmask 523264
    %v1189 = vsel %vm1187, %v1173, 0
    %1191 = vmatprep.subr.mxu0 0.0
    %1192 = vmatpush1.msra.mxu0 0.0
    %1193 = vmatprep.subr.mxu0 0.0
    %1194 = vmatpush1.msra.mxu0 0.0
    %1195 = vmatprep.subr.mxu0 0.0
    %1196 = vmatpush1.msra.mxu0 0.0
    %1197 = vmatprep.subr.mxu0 0.0
    %1198 = vmatpush1.msra.mxu0 0.0
    %1199 = vmatprep.subr.mxu0 0.0
    %1200 = vmatpush1.msra.mxu0 0.0
    %1201 = vmatprep.subr.mxu0 0.0
    %1202 = vmatpush1.msra.mxu0 0.0
    %1203 = vmatprep.subr.mxu0 0.0
    %1204 = vmatpush1.msra.mxu0 0.0
    %1205 = vmatprep.subr.mxu0 0.0
    %1206 = vmatpush1.msra.mxu0 0.0
    %1207 = vmatprep.subr.mxu0 0.0
    %1208 = vmatpush1.msra.mxu0 %v1181
    %1209 = vmatprep.subr.mxu0 0.0
    %1210 = vmatpush1.msra.mxu0 %v1180
    %1211 = vmatprep.subr.mxu0 0.0
    %1212 = vmatpush1.msra.mxu0 %v1179
    %1213 = vmatprep.subr.mxu0 0.0
    %1214 = vmatpush1.msra.mxu0 %v1178
    %1215 = vmatprep.subr.mxu0 0.0
    %1216 = vmatpush1.msra.mxu0 %v1177
    %1217 = vmatprep.subr.mxu0 0.0
    %1218 = vmatpush1.msra.mxu0 %v1176
    %1219 = vmatprep.subr.mxu0 0.0
    %1220 = vmatpush1.msra.mxu0 %v1175
    %1221 = vmatprep.subr.mxu0 0.0
    %1222 = vmatpush1.msra.mxu0 %v1174
    %1223 = vmatprep.subr.mxu0 0.0
    %1224 = vmatpush2.msra.mxu0 0.0
    %1225 = vmatprep.subr.mxu0 0.0
    %1226 = vmatpush2.msra.mxu0 0.0
    %1227 = vmatprep.subr.mxu0 0.0
    %1228 = vmatpush2.msra.mxu0 0.0
    %1229 = vmatprep.subr.mxu0 0.0
    %1230 = vmatpush2.msra.mxu0 0.0
    %1231 = vmatprep.subr.mxu0 0.0
    %1232 = vmatpush2.msra.mxu0 0.0
    %1233 = vmatprep.subr.mxu0 0.0
    %1234 = vmatpush2.msra.mxu0 0.0
    %1235 = vmatprep.subr.mxu0 0.0
    %1236 = vmatpush2.msra.mxu0 0.0
    %1237 = vmatprep.subr.mxu0 0.0
    %1238 = vmatpush2.msra.mxu0 0.0
    %1239 = vmatprep.subr.mxu0 0.0
    %1240 = vmatpush2.msra.mxu0 0.0
    %1241 = vmatprep.subr.mxu0 0.0
    %1242 = vmatpush2.msra.mxu0 0.0
    %1243 = vmatprep.subr.mxu0 0.0
    %1244 = vmatpush2.msra.mxu0 0.0
    %1245 = vmatprep.subr.mxu0 0.0
    %1246 = vmatpush2.msra.mxu0 0.0
    %1247 = vmatprep.subr.mxu0 0.0
    %1248 = vmatpush2.msra.mxu0 0.0
    %1249 = vmatprep.subr.mxu0 0.0
    %1250 = vmatpush2.msra.mxu0 0.0
    %1251 = vmatprep.subr.mxu0 0.0
    %1252 = vmatpush2.msra.mxu0 0.0
    %1253 = vmatprep.subr.mxu0 0.0
    %1254 = vmatpush2.msra.mxu0 0.0
    %1255 = vmatprep.mubr.f32.mxu0 0.0
    %1256 = vmatmul.mubr.f32.gmra.mxu0 %v1189
    %v1257 = vpop.f32.mrf.mxu0
    %v1258 = vadd.f32 %v1186, %v1257
    %v1259 = vpop.f32.mrf.mxu0
    %1260 = vdwg.mxu0
    %v1261 = vmul.f32 %v1170, %v1258
    %v1262 = vld [vmem:[#allocation2 + $0xc8] sm:$0xff]
    %v1263 = vld [vmem:[#allocation2 + $0xd0] sm:$0xff]
    %v1264 = vld [vmem:[#allocation2 + $0xd8] sm:$0xff]
    %v1265 = vld [vmem:[#allocation2 + $0xe0] sm:$0xff]
    %v1266 = vld [vmem:[#allocation2 + $0xe8] sm:$0xff]
    %v1267 = vld [vmem:[#allocation2 + $0xf0] sm:$0xff]
    %v1268 = vld [vmem:[#allocation2 + $0xf8] sm:$0xff]
    %v1269 = vld [vmem:[#allocation2 + $0x100] sm:$0xff]
    %v1270 = vld [vmem:[#allocation2 + $0x108] sm:$0xff]
    %v1271 = vld [vmem:[#allocation2 + $0x110] sm:$0xff]
    %v1272 = vld [vmem:[#allocation2 + $0x118] sm:$0xff]
    %v1273 = vld [vmem:[#allocation2 + $0x120] sm:$0xff]
    %v1274 = vld [vmem:[#allocation2 + $0x128] sm:$0xff]
    %v1275 = vld [vmem:[#allocation2 + $0x130] sm:$0xff]
    %v1276 = vld [vmem:[#allocation2 + $0x138] sm:$0xff]
    %v1277 = vld [vmem:[#allocation2 + $0x140] sm:$0xff]
    %1278 = vmatprep.subr.mxu0 0.0
    %1279 = vmatpush1.msra.mxu0 %v1277
    %1280 = vmatprep.subr.mxu0 0.0
    %1281 = vmatpush1.msra.mxu0 %v1276
    %1282 = vmatprep.subr.mxu0 0.0
    %1283 = vmatpush1.msra.mxu0 %v1275
    %1284 = vmatprep.subr.mxu0 0.0
    %1285 = vmatpush1.msra.mxu0 %v1274
    %1286 = vmatprep.subr.mxu0 0.0
    %1287 = vmatpush1.msra.mxu0 %v1273
    %1288 = vmatprep.subr.mxu0 0.0
    %1289 = vmatpush1.msra.mxu0 %v1272
    %1290 = vmatprep.subr.mxu0 0.0
    %1291 = vmatpush1.msra.mxu0 %v1271
    %1292 = vmatprep.subr.mxu0 0.0
    %1293 = vmatpush1.msra.mxu0 %v1270
    %1294 = vmatprep.subr.mxu0 0.0
    %1295 = vmatpush1.msra.mxu0 %v1269
    %1296 = vmatprep.subr.mxu0 0.0
    %1297 = vmatpush1.msra.mxu0 %v1268
    %1298 = vmatprep.subr.mxu0 0.0
    %1299 = vmatpush1.msra.mxu0 %v1267
    %1300 = vmatprep.subr.mxu0 0.0
    %1301 = vmatpush1.msra.mxu0 %v1266
    %1302 = vmatprep.subr.mxu0 0.0
    %1303 = vmatpush1.msra.mxu0 %v1265
    %1304 = vmatprep.subr.mxu0 0.0
    %1305 = vmatpush1.msra.mxu0 %v1264
    %1306 = vmatprep.subr.mxu0 0.0
    %1307 = vmatpush1.msra.mxu0 %v1263
    %1308 = vmatprep.subr.mxu0 0.0
    %1309 = vmatpush1.msra.mxu0 %v1262
    %1310 = vmatprep.subr.mxu0 0.0
    %1311 = vmatpush2.msra.mxu0 0.0
    %1312 = vmatprep.subr.mxu0 0.0
    %1313 = vmatpush2.msra.mxu0 0.0
    %1314 = vmatprep.subr.mxu0 0.0
    %1315 = vmatpush2.msra.mxu0 0.0
    %1316 = vmatprep.subr.mxu0 0.0
    %1317 = vmatpush2.msra.mxu0 0.0
    %1318 = vmatprep.subr.mxu0 0.0
    %1319 = vmatpush2.msra.mxu0 0.0
    %1320 = vmatprep.subr.mxu0 0.0
    %1321 = vmatpush2.msra.mxu0 0.0
    %1322 = vmatprep.subr.mxu0 0.0
    %1323 = vmatpush2.msra.mxu0 0.0
    %1324 = vmatprep.subr.mxu0 0.0
    %1325 = vmatpush2.msra.mxu0 0.0
    %1326 = vmatprep.subr.mxu0 0.0
    %1327 = vmatpush2.msra.mxu0 0.0
    %1328 = vmatprep.subr.mxu0 0.0
    %1329 = vmatpush2.msra.mxu0 0.0
    %1330 = vmatprep.subr.mxu0 0.0
    %1331 = vmatpush2.msra.mxu0 0.0
    %1332 = vmatprep.subr.mxu0 0.0
    %1333 = vmatpush2.msra.mxu0 0.0
    %1334 = vmatprep.subr.mxu0 0.0
    %1335 = vmatpush2.msra.mxu0 0.0
    %1336 = vmatprep.subr.mxu0 0.0
    %1337 = vmatpush2.msra.mxu0 0.0
    %1338 = vmatprep.subr.mxu0 0.0
    %1339 = vmatpush2.msra.mxu0 0.0
    %1340 = vmatprep.subr.mxu0 0.0
    %1341 = vmatpush2.msra.mxu0 0.0
    %1342 = vmatprep.mubr.f32.mxu0 0.0
    %1343 = vmatmul.mubr.f32.gmra.mxu0 %v1261
    %v1344 = vpop.f32.mrf.mxu0
    %v1345 = vadd.f32 0.0, %v1344
    %v1346 = vpop.f32.mrf.mxu0
    %1347 = vdwg.mxu0
    %v1348 = vmax.f32 %v1345, 0.0
    %v1349 = vrsqrt.pop %v1348
    %v1350 = vmul.f32 %v1348, %v1349
    %vm1351 = vcmp.eq.f32.partialorder %v1348, inf
    %v1352 = vsel %vm1351, %v1348, %v1350
    %vm1353 = vcmp.eq.f32.partialorder %v1348, 0.0
    %v1354 = vand.u32 %v1348, 2147483648
    %v1355 = vsel %vm1353, %v1354, %v1352
    %v1356 = vsub.f32 0.0, %v1345
    %v1357 = vmax.f32 %v1356, 0.0
    %v1358 = vrsqrt.pop %v1357
    %v1359 = vmul.f32 %v1357, %v1358
    %vm1360 = vcmp.eq.f32.partialorder %v1357, inf
    %v1361 = vsel %vm1360, %v1357, %v1359
    %vm1362 = vcmp.eq.f32.partialorder %v1357, 0.0
    %v1363 = vand.u32 %v1357, 2147483648
    %v1364 = vsel %vm1362, %v1363, %v1361
    %v1365 = vsub.f32 %v1355, %v1364
    %v1366 = vmul.f32 %v1365, %v1365
    %v1367 = vsel %vm234, %v1366, 0.0
    %1368 = vadd.xlane.f32.xlu0 %v1367
    %v1369 = vpop.xlane.xlu0 %1368
    %v1370 = vrsqrt.pop %v1369
    %v1371 = vmul.f32 %v1369, %v1370
    %vm1372 = vcmp.eq.f32.partialorder %v1369, inf
    %v1373 = vsel %vm1372, %v1369, %v1371
    %vm1374 = vcmp.eq.f32.partialorder %v1369, 0.0
    %v1375 = vand.u32 %v1369, 2147483648
    %v1376 = vsel %vm1374, %v1375, %v1373
    %v1377 = vmax.f32 %v1376, 1e-12
    %v1378 = vrcp.pop %v1377
    %v1379 = vmul.f32 %v1365, %v1378
    %v1380 = vld [vmem:[#allocation2 + $0x148] sm:$0xff]
    %v1381 = vld [vmem:[#allocation2 + $0x150] sm:$0xff]
    %v1382 = vld [vmem:[#allocation2 + $0x158] sm:$0xff]
    %v1383 = vld [vmem:[#allocation2 + $0x160] sm:$0xff]
    %v1384 = vld [vmem:[#allocation2 + $0x168] sm:$0x1]
    %v1385 = vlaneseq
    %v1386 = vshrl.u32 %v1385, 7
    %v1387 = vsub.s32 0, %v1386
    %v1388 = vrot.slane %v1384, %v1387
    %v1390 = vsel %vm234, %v1379, 0
    %1392 = vmatprep.subr.mxu0 0.0
    %1393 = vmatpush1.msra.mxu0 0.0
    %1394 = vmatprep.subr.mxu0 0.0
    %1395 = vmatpush1.msra.mxu0 0.0
    %1396 = vmatprep.subr.mxu0 0.0
    %1397 = vmatpush1.msra.mxu0 0.0
    %1398 = vmatprep.subr.mxu0 0.0
    %1399 = vmatpush1.msra.mxu0 0.0
    %1400 = vmatprep.subr.mxu0 0.0
    %1401 = vmatpush1.msra.mxu0 0.0
    %1402 = vmatprep.subr.mxu0 0.0
    %1403 = vmatpush1.msra.mxu0 0.0
    %1404 = vmatprep.subr.mxu0 0.0
    %1405 = vmatpush1.msra.mxu0 0.0
    %1406 = vmatprep.subr.mxu0 0.0
    %1407 = vmatpush1.msra.mxu0 0.0
    %1408 = vmatprep.subr.mxu0 0.0
    %1409 = vmatpush1.msra.mxu0 0.0
    %1410 = vmatprep.subr.mxu0 0.0
    %1411 = vmatpush1.msra.mxu0 0.0
    %1412 = vmatprep.subr.mxu0 0.0
    %1413 = vmatpush1.msra.mxu0 0.0
    %1414 = vmatprep.subr.mxu0 0.0
    %1415 = vmatpush1.msra.mxu0 0.0
    %1416 = vmatprep.subr.mxu0 0.0
    %1417 = vmatpush1.msra.mxu0 %v1383
    %1418 = vmatprep.subr.mxu0 0.0
    %1419 = vmatpush1.msra.mxu0 %v1382
    %1420 = vmatprep.subr.mxu0 0.0
    %1421 = vmatpush1.msra.mxu0 %v1381
    %1422 = vmatprep.subr.mxu0 0.0
    %1423 = vmatpush1.msra.mxu0 %v1380
    %1424 = vmatprep.subr.mxu0 0.0
    %1425 = vmatpush2.msra.mxu0 0.0
    %1426 = vmatprep.subr.mxu0 0.0
    %1427 = vmatpush2.msra.mxu0 0.0
    %1428 = vmatprep.subr.mxu0 0.0
    %1429 = vmatpush2.msra.mxu0 0.0
    %1430 = vmatprep.subr.mxu0 0.0
    %1431 = vmatpush2.msra.mxu0 0.0
    %1432 = vmatprep.subr.mxu0 0.0
    %1433 = vmatpush2.msra.mxu0 0.0
    %1434 = vmatprep.subr.mxu0 0.0
    %1435 = vmatpush2.msra.mxu0 0.0
    %1436 = vmatprep.subr.mxu0 0.0
    %1437 = vmatpush2.msra.mxu0 0.0
    %1438 = vmatprep.subr.mxu0 0.0
    %1439 = vmatpush2.msra.mxu0 0.0
    %1440 = vmatprep.subr.mxu0 0.0
    %1441 = vmatpush2.msra.mxu0 0.0
    %1442 = vmatprep.subr.mxu0 0.0
    %1443 = vmatpush2.msra.mxu0 0.0
    %1444 = vmatprep.subr.mxu0 0.0
    %1445 = vmatpush2.msra.mxu0 0.0
    %1446 = vmatprep.subr.mxu0 0.0
    %1447 = vmatpush2.msra.mxu0 0.0
    %1448 = vmatprep.subr.mxu0 0.0
    %1449 = vmatpush2.msra.mxu0 0.0
    %1450 = vmatprep.subr.mxu0 0.0
    %1451 = vmatpush2.msra.mxu0 0.0
    %1452 = vmatprep.subr.mxu0 0.0
    %1453 = vmatpush2.msra.mxu0 0.0
    %1454 = vmatprep.subr.mxu0 0.0
    %1455 = vmatpush2.msra.mxu0 0.0
    %1456 = vmatprep.mubr.f32.mxu0 0.0
    %1457 = vmatmul.mubr.f32.gmra.mxu0 %v1390
    %v1458 = vpop.f32.mrf.mxu0
    %v1459 = vadd.f32 %v1388, %v1458
    %v1460 = vpop.f32.mrf.mxu0
    %1461 = vdwg.mxu0
    %vm1462 = vcmask 130048
    %v1463 = vsel %vm1462, %v1459, -inf
    %1464 = vmax.xlane.f32.xlu0 %v1463
    %v1465 = vpop.xlane.xlu0 %1464
    %v1466 = vsub.f32 %v1459, %v1465
    %v1467 = vmul.f32 %v1466, 1.442695
    %v1468 = vpow.pop %v1467
    %v1469 = vsel %vm1462, %v1468, 0.0
    %1470 = vadd.xlane.f32.xlu0 %v1469
    %v1471 = vpop.xlane.xlu0 %1470
    %v1472 = vlog2.pop %v1471
    %v1473 = vmul.f32 %v1472, 0.6931472
    %v1474 = vsub.f32 %v1466, %v1473
    %1475 = vst.msk [vmem:[#allocation5] sm:$0xff] %vm1462, %v1474
    // Predicated region
    $region18: #{mfb_baseline_forward.1} parent=1 // pred_check
      _
    $region19: #{mfb_baseline_forward.1} parent=1 // pred_check_branch
      %1477 = sbr.rel (0) target = $region21
    $region20: #{mfb_baseline_forward.1} parent=1 // pred_region
      %s1479 = ssub.s32 128, 128
      %1480 = vsyncadd [#allocation4], %s1479
      %s1482 = sshll.u32 [#allocation5], 4
      %s1483 = int_to_ptr.vmem [resolvable:$true] %s1482
      %1485 = dma.vmem_to_hbm [thread:$0]  %s1483, 128, %s3, [#allocation4]
    $region21: #{mfb_baseline_forward.1} parent=1 // pred_fallthru
      _
    // Predicated region
    $region22: #{mfb_baseline_forward.1} parent=1 // pred_check
      _
    $region23: #{mfb_baseline_forward.1} parent=1 // pred_check_branch
      %1487 = sbr.rel (0) target = $region25
    $region24: #{mfb_baseline_forward.1} parent=1 // pred_region
      %1488 = dma.done [#allocation4], 128
    $region25: #{mfb_baseline_forward.1} parent=1 // pred_fallthru
      _
    %1489 = vsyncpa [#allocation3], 1
    %1490 = vsyncpa [#allocation4], 1

</llo_original>
